<compile_context>
chip_gen: v7x
topology: tpu7x:2x2x1
jax: 0.10.0
libtpu: 0.0.40
codegen_flags: <defaults>
</compile_context>

<pallas_src>
import numpy as np
import jax
import jax.numpy as jnp
from jax import lax
from jax.experimental import pallas as pl
from jax.experimental.pallas import tpu as pltpu

# ----- configs (mirrors the `configs` object of the PyTorch module) -----
NUM_FEATURES = 4     # C
SEQ_LEN = 8          # L
HIDDEN = 32          # H
BATCH = 2            # B
EPS = 1e-5           # nn.BatchNorm1d default eps

# ----- packed-parameter layout: one [PK_ROWS, PK_COLS] f32 array -----
PK_ROWS = 32
PK_COLS = 128
COL_R = 2 * HIDDEN       # 64: column offset of the "right half" of the pack
ROW_WOUT = 8             # per-step output-Linear weights live in rows 8..8+L
ROW_BIAS = 16            # RNN biases
ROW_MISC = 24            # gamma / beta / b_out

assert 2 * HIDDEN <= COL_R and COL_R + 2 * HIDDEN <= PK_COLS
assert HIDDEN <= PK_ROWS
assert NUM_FEATURES <= ROW_WOUT
assert ROW_WOUT + SEQ_LEN <= ROW_BIAS
assert ROW_BIAS + 1 <= ROW_MISC and ROW_MISC + 1 <= PK_ROWS
assert 2 * NUM_FEATURES + 1 <= 2 * HIDDEN


def birnn_kernel(x_ref, pk_ref, out_ref):
    # x_ref:  [L*B, C] time-major flattened, normalized input channels on lanes
    # pk_ref: [32, 128] packed parameters (lane-dense, single DMA)
    LB, C = x_ref.shape
    L = SEQ_LEN
    B = LB // L
    H = HIDDEN

    # ---------- unpack parameters (static slices, once) ----------
    whh_f = pk_ref[0:H, 0:H]                                      # [H, H] = W_hh_f^T
    whh_b = pk_ref[0:H, H:2 * H]                                  # [H, H] = W_hh_b^T
    wih   = pk_ref[0:C, COL_R:COL_R + 2 * H]                      # [C, 2H] = [W_ih_f^T | W_ih_b^T]
    wf    = pk_ref[ROW_WOUT:ROW_WOUT + L, COL_R:COL_R + H]        # [L, H] output-Linear fwd slices
    wb    = pk_ref[ROW_WOUT:ROW_WOUT + L, COL_R + H:COL_R + 2 * H]
    b_f   = pk_ref[ROW_BIAS:ROW_BIAS + 1, COL_R:COL_R + H]        # [1, H] = b_ih_f + b_hh_f
    b_b   = pk_ref[ROW_BIAS:ROW_BIAS + 1, COL_R + H:COL_R + 2 * H]
    gamma = pk_ref[ROW_MISC:ROW_MISC + 1, COL_R:COL_R + C]        # [1, C]
    beta  = pk_ref[ROW_MISC:ROW_MISC + 1, COL_R + C:COL_R + 2 * C]
    b_out = pk_ref[ROW_MISC:ROW_MISC + 1,
                   COL_R + 2 * C:COL_R + 2 * C + 1]               # [1, 1]

    # ---------- BatchNorm1d over channels (training-mode batch statistics) ----------
    x = x_ref[...].astype(jnp.float32)                            # [L*B, C]
    n = float(LB)
    mean = jnp.sum(x, axis=0, keepdims=True) / n                  # [1, C]
    xc = x - mean
    var = jnp.sum(xc * xc, axis=0, keepdims=True) / n             # biased var, as PyTorch
    xn = xc * (lax.rsqrt(var + EPS) * gamma) + beta               # [L*B, C]

    # ---------- hoisted input projection for BOTH directions: one matmul ----------
    proj = jnp.dot(xn, wih, preferred_element_type=jnp.float32)   # [L*B, 2H]

    # ---------- fused fwd/bwd recurrence, fully unrolled (static L) ----------
    hf = jnp.zeros((B, H), jnp.float32)
    hb = jnp.zeros((B, H), jnp.float32)
    accf = jnp.zeros((B, H), jnp.float32)                         # output-Linear partials (VPU only)
    accb = jnp.zeros((B, H), jnp.float32)
    for i in range(L):
        tb = L - 1 - i                                            # backward direction time index
        zf = proj[i * B:(i + 1) * B, 0:H] + b_f                   # [B, H]
        zb = proj[tb * B:(tb + 1) * B, H:2 * H] + b_b
        if i > 0:                                                 # h_0 = 0 -> skip first h @ W_hh
            zf = zf + jnp.dot(hf, whh_f, preferred_element_type=jnp.float32)
            zb = zb + jnp.dot(hb, whh_b, preferred_element_type=jnp.float32)
        hf = jnp.tanh(zf)
        hb = jnp.tanh(zb)
        accf = accf + hf * wf[i:i + 1, :]
        accb = accb + hb * wb[tb:tb + 1, :]

    # single cross-lane reduce for the output Linear, plus its bias
    out_ref[...] = jnp.sum(accf + accb, axis=-1, keepdims=True) + b_out   # [B, 1]


def pack_params(params, *, C, L, H):
    """Pack all tiny parameter arrays into one lane-dense [32, 128] f32 block."""
    pk = jnp.zeros((PK_ROWS, PK_COLS), jnp.float32)
    pk = pk.at[0:H, 0:H].set(params["whh_f"])
    pk = pk.at[0:H, H:2 * H].set(params["whh_b"])
    wih = jnp.concatenate([params["wih_f"], params["wih_b"]], axis=1)       # [C, 2H]
    pk = pk.at[0:C, COL_R:COL_R + 2 * H].set(wih)
    # nn.Linear weight [1, 2*L*H] maps flattened (t, direction, h) -> per-step/dir slices
    w_out = params["w_out"].reshape(L, 2, H)
    pk = pk.at[ROW_WOUT:ROW_WOUT + L, COL_R:COL_R + H].set(w_out[:, 0, :])
    pk = pk.at[ROW_WOUT:ROW_WOUT + L, COL_R + H:COL_R + 2 * H].set(w_out[:, 1, :])
    pk = pk.at[ROW_BIAS, COL_R:COL_R + H].set(params["b_f"])
    pk = pk.at[ROW_BIAS, COL_R + H:COL_R + 2 * H].set(params["b_b"])
    pk = pk.at[ROW_MISC, COL_R:COL_R + C].set(params["gamma"])
    pk = pk.at[ROW_MISC, COL_R + C:COL_R + 2 * C].set(params["beta"])
    pk = pk.at[ROW_MISC, COL_R + 2 * C].set(params["b_out"][0])
    return pk


def birnn_forward(x, params):
    """x: [B, L, C] (PyTorch batch_first input). Returns [B] (output.squeeze(-1))."""
    B, L, C = x.shape
    H = params["whh_f"].shape[0]
    assert (L, C, H) == (SEQ_LEN, NUM_FEATURES, HIDDEN)

    # time-major flatten: row index = t * B + b
    x_flat = jnp.transpose(x, (1, 0, 2)).reshape(L * B, C).astype(jnp.float32)
    pk = pack_params(params, C=C, L=L, H=H)

    out = pl.pallas_call(
        birnn_kernel,
        out_shape=jax.ShapeDtypeStruct((B, 1), jnp.float32),
        in_specs=[pl.BlockSpec(memory_space=pltpu.MemorySpace.VMEM)] * 2,
        out_specs=pl.BlockSpec(memory_space=pltpu.MemorySpace.VMEM),
    )(x_flat, pk)
    return out[:, 0]


def init_params(key, C, L, H):
    """Deterministic parameter init mirroring the PyTorch module's shapes."""
    ks = jax.random.split(key, 10)
    s_rnn = 1.0 / np.sqrt(H)
    s_lin = 1.0 / np.sqrt(2 * L * H)
    u = lambda k, shape, s: jax.random.uniform(k, shape, jnp.float32, -s, s)
    return dict(
        gamma=jnp.ones((C,), jnp.float32),                  # BatchNorm weight
        beta=jnp.zeros((C,), jnp.float32),                  # BatchNorm bias
        wih_f=u(ks[0], (C, H), s_rnn),                      # W_ih_l0^T
        whh_f=u(ks[1], (H, H), s_rnn),                      # W_hh_l0^T
        b_f=u(ks[2], (H,), s_rnn) + u(ks[3], (H,), s_rnn),  # b_ih_l0 + b_hh_l0
        wih_b=u(ks[4], (C, H), s_rnn),                      # reverse direction
        whh_b=u(ks[5], (H, H), s_rnn),
        b_b=u(ks[6], (H,), s_rnn) + u(ks[7], (H,), s_rnn),
        w_out=u(ks[8], (1, 2 * L * H), s_lin),              # nn.Linear(2*L*H, 1).weight
        b_out=u(ks[9], (1,), s_lin),                        # nn.Linear bias
    )


def birnn_reference(x, params):
    """Pure-JAX reference of the PyTorch forward (training-mode BatchNorm)."""
    B, L, C = x.shape
    H = params["whh_f"].shape[0]
    x2 = x.reshape(-1, C)
    mean = x2.mean(0)
    var = ((x2 - mean) ** 2).mean(0)
    xn = (x - mean) / jnp.sqrt(var + EPS) * params["gamma"] + params["beta"]
    xt = jnp.transpose(xn, (1, 0, 2))                               # [L, B, C]

    def make_step(wih, whh, b):
        def step(h, x_t):
            h = jnp.tanh(x_t @ wih + h @ whh + b)
            return h, h
        return step

    h0 = jnp.zeros((B, H), jnp.float32)
    _, hs_f = lax.scan(make_step(params["wih_f"], params["whh_f"], params["b_f"]), h0, xt)
    _, hs_b = lax.scan(make_step(params["wih_b"], params["whh_b"], params["b_b"]), h0, xt[::-1])
    hs_b = hs_b[::-1]
    out_seq = jnp.concatenate([hs_f, hs_b], axis=-1)                # [L, B, 2H]
    out_flat = jnp.transpose(out_seq, (1, 0, 2)).reshape(B, 2 * L * H)
    return (out_flat @ params["w_out"].T + params["b_out"])[:, 0]


if __name__ == "__main__":
    key = jax.random.PRNGKey(0)
    pkey, xkey = jax.random.split(key)
    params = init_params(pkey, NUM_FEATURES, SEQ_LEN, HIDDEN)
    x = jax.random.normal(xkey, (BATCH, SEQ_LEN, NUM_FEATURES), jnp.float32)

    out = birnn_forward(x, params)
    out = jax.block_until_ready(out)
    assert out.shape == (BATCH,)

    ref = birnn_reference(x, params)
    np.testing.assert_allclose(np.asarray(out), np.asarray(ref), rtol=1e-2, atol=1e-2)
    print("KERNEL_OK")
</pallas_src>

<mosaic_0001>
module attributes {stable_mosaic.version = 11 : i64} {
  func.func @birnn_kernel(%arg0: memref<16x4xf32, #tpu.memory_space<vmem>>, %arg1: memref<32x128xf32, #tpu.memory_space<vmem>>, %arg2: memref<2x1xf32, #tpu.memory_space<vmem>>) attributes {dimension_semantics = [], scalar_prefetch = 0 : i64, scratch_operands = 0 : i64, tpu.core_type = #tpu.core_type<tc>} {
    %c0 = arith.constant 0 : index
    %c0_0 = arith.constant 0 : index
    %0 = vector.load %arg1[%c0, %c0_0] : memref<32x128xf32, #tpu.memory_space<vmem>>, vector<32x32xf32>
    %c0_1 = arith.constant 0 : index
    %c32 = arith.constant 32 : index
    %1 = vector.load %arg1[%c0_1, %c32] : memref<32x128xf32, #tpu.memory_space<vmem>>, vector<32x32xf32>
    %c0_2 = arith.constant 0 : index
    %c64 = arith.constant 64 : index
    %2 = vector.load %arg1[%c0_2, %c64] : memref<32x128xf32, #tpu.memory_space<vmem>>, vector<4x64xf32>
    %c8 = arith.constant 8 : index
    %c64_3 = arith.constant 64 : index
    %3 = vector.load %arg1[%c8, %c64_3] : memref<32x128xf32, #tpu.memory_space<vmem>>, vector<8x32xf32>
    %c8_4 = arith.constant 8 : index
    %c96 = arith.constant 96 : index
    %4 = vector.load %arg1[%c8_4, %c96] : memref<32x128xf32, #tpu.memory_space<vmem>>, vector<8x32xf32>
    %c16 = arith.constant 16 : index
    %c64_5 = arith.constant 64 : index
    %5 = vector.load %arg1[%c16, %c64_5] : memref<32x128xf32, #tpu.memory_space<vmem>>, vector<1x32xf32>
    %c16_6 = arith.constant 16 : index
    %c96_7 = arith.constant 96 : index
    %6 = vector.load %arg1[%c16_6, %c96_7] : memref<32x128xf32, #tpu.memory_space<vmem>>, vector<1x32xf32>
    %c24 = arith.constant 24 : index
    %c64_8 = arith.constant 64 : index
    %7 = vector.load %arg1[%c24, %c64_8] : memref<32x128xf32, #tpu.memory_space<vmem>>, vector<1x4xf32>
    %c24_9 = arith.constant 24 : index
    %c68 = arith.constant 68 : index
    %8 = vector.load %arg1[%c24_9, %c68] : memref<32x128xf32, #tpu.memory_space<vmem>>, vector<1x4xf32>
    %c24_10 = arith.constant 24 : index
    %c72 = arith.constant 72 : index
    %9 = vector.load %arg1[%c24_10, %c72] : memref<32x128xf32, #tpu.memory_space<vmem>>, vector<1x1xf32>
    %c0_11 = arith.constant 0 : index
    %c0_12 = arith.constant 0 : index
    %10 = vector.load %arg0[%c0_11, %c0_12] : memref<16x4xf32, #tpu.memory_space<vmem>>, vector<16x4xf32>
    %cst = arith.constant dense<0.000000e+00> : vector<4xf32>
    %11 = vector.multi_reduction <add>, %10, %cst [0] : vector<16x4xf32> to vector<4xf32>
    %12 = vector.shape_cast %11 : vector<4xf32> to vector<1x4xf32>
    %cst_13 = arith.constant 1.600000e+01 : f32
    %13 = vector.broadcast %cst_13 : f32 to vector<1x4xf32>
    %14 = arith.divf %12, %13 : vector<1x4xf32>
    %15 = vector.broadcast %14 : vector<1x4xf32> to vector<16x4xf32>
    %16 = arith.subf %10, %15 : vector<16x4xf32>
    %17 = arith.mulf %16, %16 : vector<16x4xf32>
    %cst_14 = arith.constant dense<0.000000e+00> : vector<4xf32>
    %18 = vector.multi_reduction <add>, %17, %cst_14 [0] : vector<16x4xf32> to vector<4xf32>
    %19 = vector.shape_cast %18 : vector<4xf32> to vector<1x4xf32>
    %cst_15 = arith.constant 1.600000e+01 : f32
    %20 = vector.broadcast %cst_15 : f32 to vector<1x4xf32>
    %21 = arith.divf %19, %20 : vector<1x4xf32>
    %cst_16 = arith.constant 9.99999974E-6 : f32
    %22 = vector.broadcast %cst_16 : f32 to vector<1x4xf32>
    %23 = arith.addf %21, %22 : vector<1x4xf32>
    %24 = math.rsqrt %23 : vector<1x4xf32>
    %25 = arith.mulf %24, %7 : vector<1x4xf32>
    %26 = vector.broadcast %25 : vector<1x4xf32> to vector<16x4xf32>
    %27 = arith.mulf %16, %26 : vector<16x4xf32>
    %28 = vector.broadcast %8 : vector<1x4xf32> to vector<16x4xf32>
    %29 = arith.addf %27, %28 : vector<16x4xf32>
    %cst_17 = arith.constant dense<0.000000e+00> : vector<16x64xf32>
    %30 = tpu.matmul %29, %2, %cst_17 {dimension_numbers = #tpu.dot_dimension_numbers<[1], [0], [0], [1], [0, 0, 1, 1], [], []>} : vector<16x4xf32>, vector<4x64xf32>, vector<16x64xf32> -> vector<16x64xf32>
    %cst_18 = arith.constant 0.000000e+00 : f32
    %31 = vector.broadcast %cst_18 : f32 to vector<2x32xf32>
    %cst_19 = arith.constant 0.000000e+00 : f32
    %32 = vector.broadcast %cst_19 : f32 to vector<2x32xf32>
    %33 = vector.extract_strided_slice %30 {offsets = [0, 0], sizes = [2, 32], strides = [1, 1]} : vector<16x64xf32> to vector<2x32xf32>
    %34 = vector.broadcast %5 : vector<1x32xf32> to vector<2x32xf32>
    %35 = arith.addf %33, %34 : vector<2x32xf32>
    %36 = vector.extract_strided_slice %30 {offsets = [14, 32], sizes = [2, 32], strides = [1, 1]} : vector<16x64xf32> to vector<2x32xf32>
    %37 = vector.broadcast %6 : vector<1x32xf32> to vector<2x32xf32>
    %38 = arith.addf %36, %37 : vector<2x32xf32>
    %39 = math.tanh %35 : vector<2x32xf32>
    %40 = math.tanh %38 : vector<2x32xf32>
    %41 = vector.extract_strided_slice %3 {offsets = [0, 0], sizes = [1, 32], strides = [1, 1]} : vector<8x32xf32> to vector<1x32xf32>
    %42 = vector.broadcast %41 : vector<1x32xf32> to vector<2x32xf32>
    %43 = arith.mulf %39, %42 : vector<2x32xf32>
    %44 = arith.addf %31, %43 : vector<2x32xf32>
    %45 = vector.extract_strided_slice %4 {offsets = [7, 0], sizes = [1, 32], strides = [1, 1]} : vector<8x32xf32> to vector<1x32xf32>
    %46 = vector.broadcast %45 : vector<1x32xf32> to vector<2x32xf32>
    %47 = arith.mulf %40, %46 : vector<2x32xf32>
    %48 = arith.addf %32, %47 : vector<2x32xf32>
    %49 = vector.extract_strided_slice %30 {offsets = [2, 0], sizes = [2, 32], strides = [1, 1]} : vector<16x64xf32> to vector<2x32xf32>
    %50 = vector.broadcast %5 : vector<1x32xf32> to vector<2x32xf32>
    %51 = arith.addf %49, %50 : vector<2x32xf32>
    %52 = vector.extract_strided_slice %30 {offsets = [12, 32], sizes = [2, 32], strides = [1, 1]} : vector<16x64xf32> to vector<2x32xf32>
    %53 = vector.broadcast %6 : vector<1x32xf32> to vector<2x32xf32>
    %54 = arith.addf %52, %53 : vector<2x32xf32>
    %cst_20 = arith.constant dense<0.000000e+00> : vector<2x32xf32>
    %55 = tpu.matmul %39, %0, %cst_20 {dimension_numbers = #tpu.dot_dimension_numbers<[1], [0], [0], [1], [0, 0, 1, 1], [], []>} : vector<2x32xf32>, vector<32x32xf32>, vector<2x32xf32> -> vector<2x32xf32>
    %56 = arith.addf %51, %55 : vector<2x32xf32>
    %cst_21 = arith.constant dense<0.000000e+00> : vector<2x32xf32>
    %57 = tpu.matmul %40, %1, %cst_21 {dimension_numbers = #tpu.dot_dimension_numbers<[1], [0], [0], [1], [0, 0, 1, 1], [], []>} : vector<2x32xf32>, vector<32x32xf32>, vector<2x32xf32> -> vector<2x32xf32>
    %58 = arith.addf %54, %57 : vector<2x32xf32>
    %59 = math.tanh %56 : vector<2x32xf32>
    %60 = math.tanh %58 : vector<2x32xf32>
    %61 = vector.extract_strided_slice %3 {offsets = [1, 0], sizes = [1, 32], strides = [1, 1]} : vector<8x32xf32> to vector<1x32xf32>
    %62 = vector.broadcast %61 : vector<1x32xf32> to vector<2x32xf32>
    %63 = arith.mulf %59, %62 : vector<2x32xf32>
    %64 = arith.addf %44, %63 : vector<2x32xf32>
    %65 = vector.extract_strided_slice %4 {offsets = [6, 0], sizes = [1, 32], strides = [1, 1]} : vector<8x32xf32> to vector<1x32xf32>
    %66 = vector.broadcast %65 : vector<1x32xf32> to vector<2x32xf32>
    %67 = arith.mulf %60, %66 : vector<2x32xf32>
    %68 = arith.addf %48, %67 : vector<2x32xf32>
    %69 = vector.extract_strided_slice %30 {offsets = [4, 0], sizes = [2, 32], strides = [1, 1]} : vector<16x64xf32> to vector<2x32xf32>
    %70 = vector.broadcast %5 : vector<1x32xf32> to vector<2x32xf32>
    %71 = arith.addf %69, %70 : vector<2x32xf32>
    %72 = vector.extract_strided_slice %30 {offsets = [10, 32], sizes = [2, 32], strides = [1, 1]} : vector<16x64xf32> to vector<2x32xf32>
    %73 = vector.broadcast %6 : vector<1x32xf32> to vector<2x32xf32>
    %74 = arith.addf %72, %73 : vector<2x32xf32>
    %cst_22 = arith.constant dense<0.000000e+00> : vector<2x32xf32>
    %75 = tpu.matmul %59, %0, %cst_22 {dimension_numbers = #tpu.dot_dimension_numbers<[1], [0], [0], [1], [0, 0, 1, 1], [], []>} : vector<2x32xf32>, vector<32x32xf32>, vector<2x32xf32> -> vector<2x32xf32>
    %76 = arith.addf %71, %75 : vector<2x32xf32>
    %cst_23 = arith.constant dense<0.000000e+00> : vector<2x32xf32>
    %77 = tpu.matmul %60, %1, %cst_23 {dimension_numbers = #tpu.dot_dimension_numbers<[1], [0], [0], [1], [0, 0, 1, 1], [], []>} : vector<2x32xf32>, vector<32x32xf32>, vector<2x32xf32> -> vector<2x32xf32>
    %78 = arith.addf %74, %77 : vector<2x32xf32>
    %79 = math.tanh %76 : vector<2x32xf32>
    %80 = math.tanh %78 : vector<2x32xf32>
    %81 = vector.extract_strided_slice %3 {offsets = [2, 0], sizes = [1, 32], strides = [1, 1]} : vector<8x32xf32> to vector<1x32xf32>
    %82 = vector.broadcast %81 : vector<1x32xf32> to vector<2x32xf32>
    %83 = arith.mulf %79, %82 : vector<2x32xf32>
    %84 = arith.addf %64, %83 : vector<2x32xf32>
    %85 = vector.extract_strided_slice %4 {offsets = [5, 0], sizes = [1, 32], strides = [1, 1]} : vector<8x32xf32> to vector<1x32xf32>
    %86 = vector.broadcast %85 : vector<1x32xf32> to vector<2x32xf32>
    %87 = arith.mulf %80, %86 : vector<2x32xf32>
    %88 = arith.addf %68, %87 : vector<2x32xf32>
    %89 = vector.extract_strided_slice %30 {offsets = [6, 0], sizes = [2, 32], strides = [1, 1]} : vector<16x64xf32> to vector<2x32xf32>
    %90 = vector.broadcast %5 : vector<1x32xf32> to vector<2x32xf32>
    %91 = arith.addf %89, %90 : vector<2x32xf32>
    %92 = vector.extract_strided_slice %30 {offsets = [8, 32], sizes = [2, 32], strides = [1, 1]} : vector<16x64xf32> to vector<2x32xf32>
    %93 = vector.broadcast %6 : vector<1x32xf32> to vector<2x32xf32>
    %94 = arith.addf %92, %93 : vector<2x32xf32>
    %cst_24 = arith.constant dense<0.000000e+00> : vector<2x32xf32>
    %95 = tpu.matmul %79, %0, %cst_24 {dimension_numbers = #tpu.dot_dimension_numbers<[1], [0], [0], [1], [0, 0, 1, 1], [], []>} : vector<2x32xf32>, vector<32x32xf32>, vector<2x32xf32> -> vector<2x32xf32>
    %96 = arith.addf %91, %95 : vector<2x32xf32>
    %cst_25 = arith.constant dense<0.000000e+00> : vector<2x32xf32>
    %97 = tpu.matmul %80, %1, %cst_25 {dimension_numbers = #tpu.dot_dimension_numbers<[1], [0], [0], [1], [0, 0, 1, 1], [], []>} : vector<2x32xf32>, vector<32x32xf32>, vector<2x32xf32> -> vector<2x32xf32>
    %98 = arith.addf %94, %97 : vector<2x32xf32>
    %99 = math.tanh %96 : vector<2x32xf32>
    %100 = math.tanh %98 : vector<2x32xf32>
    %101 = vector.extract_strided_slice %3 {offsets = [3, 0], sizes = [1, 32], strides = [1, 1]} : vector<8x32xf32> to vector<1x32xf32>
    %102 = vector.broadcast %101 : vector<1x32xf32> to vector<2x32xf32>
    %103 = arith.mulf %99, %102 : vector<2x32xf32>
    %104 = arith.addf %84, %103 : vector<2x32xf32>
    %105 = vector.extract_strided_slice %4 {offsets = [4, 0], sizes = [1, 32], strides = [1, 1]} : vector<8x32xf32> to vector<1x32xf32>
    %106 = vector.broadcast %105 : vector<1x32xf32> to vector<2x32xf32>
    %107 = arith.mulf %100, %106 : vector<2x32xf32>
    %108 = arith.addf %88, %107 : vector<2x32xf32>
    %109 = vector.extract_strided_slice %30 {offsets = [8, 0], sizes = [2, 32], strides = [1, 1]} : vector<16x64xf32> to vector<2x32xf32>
    %110 = vector.broadcast %5 : vector<1x32xf32> to vector<2x32xf32>
    %111 = arith.addf %109, %110 : vector<2x32xf32>
    %112 = vector.extract_strided_slice %30 {offsets = [6, 32], sizes = [2, 32], strides = [1, 1]} : vector<16x64xf32> to vector<2x32xf32>
    %113 = vector.broadcast %6 : vector<1x32xf32> to vector<2x32xf32>
    %114 = arith.addf %112, %113 : vector<2x32xf32>
    %cst_26 = arith.constant dense<0.000000e+00> : vector<2x32xf32>
    %115 = tpu.matmul %99, %0, %cst_26 {dimension_numbers = #tpu.dot_dimension_numbers<[1], [0], [0], [1], [0, 0, 1, 1], [], []>} : vector<2x32xf32>, vector<32x32xf32>, vector<2x32xf32> -> vector<2x32xf32>
    %116 = arith.addf %111, %115 : vector<2x32xf32>
    %cst_27 = arith.constant dense<0.000000e+00> : vector<2x32xf32>
    %117 = tpu.matmul %100, %1, %cst_27 {dimension_numbers = #tpu.dot_dimension_numbers<[1], [0], [0], [1], [0, 0, 1, 1], [], []>} : vector<2x32xf32>, vector<32x32xf32>, vector<2x32xf32> -> vector<2x32xf32>
    %118 = arith.addf %114, %117 : vector<2x32xf32>
    %119 = math.tanh %116 : vector<2x32xf32>
    %120 = math.tanh %118 : vector<2x32xf32>
    %121 = vector.extract_strided_slice %3 {offsets = [4, 0], sizes = [1, 32], strides = [1, 1]} : vector<8x32xf32> to vector<1x32xf32>
    %122 = vector.broadcast %121 : vector<1x32xf32> to vector<2x32xf32>
    %123 = arith.mulf %119, %122 : vector<2x32xf32>
    %124 = arith.addf %104, %123 : vector<2x32xf32>
    %125 = vector.extract_strided_slice %4 {offsets = [3, 0], sizes = [1, 32], strides = [1, 1]} : vector<8x32xf32> to vector<1x32xf32>
    %126 = vector.broadcast %125 : vector<1x32xf32> to vector<2x32xf32>
    %127 = arith.mulf %120, %126 : vector<2x32xf32>
    %128 = arith.addf %108, %127 : vector<2x32xf32>
    %129 = vector.extract_strided_slice %30 {offsets = [10, 0], sizes = [2, 32], strides = [1, 1]} : vector<16x64xf32> to vector<2x32xf32>
    %130 = vector.broadcast %5 : vector<1x32xf32> to vector<2x32xf32>
    %131 = arith.addf %129, %130 : vector<2x32xf32>
    %132 = vector.extract_strided_slice %30 {offsets = [4, 32], sizes = [2, 32], strides = [1, 1]} : vector<16x64xf32> to vector<2x32xf32>
    %133 = vector.broadcast %6 : vector<1x32xf32> to vector<2x32xf32>
    %134 = arith.addf %132, %133 : vector<2x32xf32>
    %cst_28 = arith.constant dense<0.000000e+00> : vector<2x32xf32>
    %135 = tpu.matmul %119, %0, %cst_28 {dimension_numbers = #tpu.dot_dimension_numbers<[1], [0], [0], [1], [0, 0, 1, 1], [], []>} : vector<2x32xf32>, vector<32x32xf32>, vector<2x32xf32> -> vector<2x32xf32>
    %136 = arith.addf %131, %135 : vector<2x32xf32>
    %cst_29 = arith.constant dense<0.000000e+00> : vector<2x32xf32>
    %137 = tpu.matmul %120, %1, %cst_29 {dimension_numbers = #tpu.dot_dimension_numbers<[1], [0], [0], [1], [0, 0, 1, 1], [], []>} : vector<2x32xf32>, vector<32x32xf32>, vector<2x32xf32> -> vector<2x32xf32>
    %138 = arith.addf %134, %137 : vector<2x32xf32>
    %139 = math.tanh %136 : vector<2x32xf32>
    %140 = math.tanh %138 : vector<2x32xf32>
    %141 = vector.extract_strided_slice %3 {offsets = [5, 0], sizes = [1, 32], strides = [1, 1]} : vector<8x32xf32> to vector<1x32xf32>
    %142 = vector.broadcast %141 : vector<1x32xf32> to vector<2x32xf32>
    %143 = arith.mulf %139, %142 : vector<2x32xf32>
    %144 = arith.addf %124, %143 : vector<2x32xf32>
    %145 = vector.extract_strided_slice %4 {offsets = [2, 0], sizes = [1, 32], strides = [1, 1]} : vector<8x32xf32> to vector<1x32xf32>
    %146 = vector.broadcast %145 : vector<1x32xf32> to vector<2x32xf32>
    %147 = arith.mulf %140, %146 : vector<2x32xf32>
    %148 = arith.addf %128, %147 : vector<2x32xf32>
    %149 = vector.extract_strided_slice %30 {offsets = [12, 0], sizes = [2, 32], strides = [1, 1]} : vector<16x64xf32> to vector<2x32xf32>
    %150 = vector.broadcast %5 : vector<1x32xf32> to vector<2x32xf32>
    %151 = arith.addf %149, %150 : vector<2x32xf32>
    %152 = vector.extract_strided_slice %30 {offsets = [2, 32], sizes = [2, 32], strides = [1, 1]} : vector<16x64xf32> to vector<2x32xf32>
    %153 = vector.broadcast %6 : vector<1x32xf32> to vector<2x32xf32>
    %154 = arith.addf %152, %153 : vector<2x32xf32>
    %cst_30 = arith.constant dense<0.000000e+00> : vector<2x32xf32>
    %155 = tpu.matmul %139, %0, %cst_30 {dimension_numbers = #tpu.dot_dimension_numbers<[1], [0], [0], [1], [0, 0, 1, 1], [], []>} : vector<2x32xf32>, vector<32x32xf32>, vector<2x32xf32> -> vector<2x32xf32>
    %156 = arith.addf %151, %155 : vector<2x32xf32>
    %cst_31 = arith.constant dense<0.000000e+00> : vector<2x32xf32>
    %157 = tpu.matmul %140, %1, %cst_31 {dimension_numbers = #tpu.dot_dimension_numbers<[1], [0], [0], [1], [0, 0, 1, 1], [], []>} : vector<2x32xf32>, vector<32x32xf32>, vector<2x32xf32> -> vector<2x32xf32>
    %158 = arith.addf %154, %157 : vector<2x32xf32>
    %159 = math.tanh %156 : vector<2x32xf32>
    %160 = math.tanh %158 : vector<2x32xf32>
    %161 = vector.extract_strided_slice %3 {offsets = [6, 0], sizes = [1, 32], strides = [1, 1]} : vector<8x32xf32> to vector<1x32xf32>
    %162 = vector.broadcast %161 : vector<1x32xf32> to vector<2x32xf32>
    %163 = arith.mulf %159, %162 : vector<2x32xf32>
    %164 = arith.addf %144, %163 : vector<2x32xf32>
    %165 = vector.extract_strided_slice %4 {offsets = [1, 0], sizes = [1, 32], strides = [1, 1]} : vector<8x32xf32> to vector<1x32xf32>
    %166 = vector.broadcast %165 : vector<1x32xf32> to vector<2x32xf32>
    %167 = arith.mulf %160, %166 : vector<2x32xf32>
    %168 = arith.addf %148, %167 : vector<2x32xf32>
    %169 = vector.extract_strided_slice %30 {offsets = [14, 0], sizes = [2, 32], strides = [1, 1]} : vector<16x64xf32> to vector<2x32xf32>
    %170 = vector.broadcast %5 : vector<1x32xf32> to vector<2x32xf32>
    %171 = arith.addf %169, %170 : vector<2x32xf32>
    %172 = vector.extract_strided_slice %30 {offsets = [0, 32], sizes = [2, 32], strides = [1, 1]} : vector<16x64xf32> to vector<2x32xf32>
    %173 = vector.broadcast %6 : vector<1x32xf32> to vector<2x32xf32>
    %174 = arith.addf %172, %173 : vector<2x32xf32>
    %cst_32 = arith.constant dense<0.000000e+00> : vector<2x32xf32>
    %175 = tpu.matmul %159, %0, %cst_32 {dimension_numbers = #tpu.dot_dimension_numbers<[1], [0], [0], [1], [0, 0, 1, 1], [], []>} : vector<2x32xf32>, vector<32x32xf32>, vector<2x32xf32> -> vector<2x32xf32>
    %176 = arith.addf %171, %175 : vector<2x32xf32>
    %cst_33 = arith.constant dense<0.000000e+00> : vector<2x32xf32>
    %177 = tpu.matmul %160, %1, %cst_33 {dimension_numbers = #tpu.dot_dimension_numbers<[1], [0], [0], [1], [0, 0, 1, 1], [], []>} : vector<2x32xf32>, vector<32x32xf32>, vector<2x32xf32> -> vector<2x32xf32>
    %178 = arith.addf %174, %177 : vector<2x32xf32>
    %179 = math.tanh %176 : vector<2x32xf32>
    %180 = math.tanh %178 : vector<2x32xf32>
    %181 = vector.extract_strided_slice %3 {offsets = [7, 0], sizes = [1, 32], strides = [1, 1]} : vector<8x32xf32> to vector<1x32xf32>
    %182 = vector.broadcast %181 : vector<1x32xf32> to vector<2x32xf32>
    %183 = arith.mulf %179, %182 : vector<2x32xf32>
    %184 = arith.addf %164, %183 : vector<2x32xf32>
    %185 = vector.extract_strided_slice %4 {offsets = [0, 0], sizes = [1, 32], strides = [1, 1]} : vector<8x32xf32> to vector<1x32xf32>
    %186 = vector.broadcast %185 : vector<1x32xf32> to vector<2x32xf32>
    %187 = arith.mulf %180, %186 : vector<2x32xf32>
    %188 = arith.addf %168, %187 : vector<2x32xf32>
    %189 = arith.addf %184, %188 : vector<2x32xf32>
    %cst_34 = arith.constant dense<0.000000e+00> : vector<2xf32>
    %190 = vector.multi_reduction <add>, %189, %cst_34 [1] : vector<2x32xf32> to vector<2xf32>
    %191 = vector.shape_cast %190 : vector<2xf32> to vector<2x1xf32>
    %192 = vector.broadcast %9 : vector<1x1xf32> to vector<2x1xf32>
    %193 = arith.addf %191, %192 : vector<2x1xf32>
    %c0_35 = arith.constant 0 : index
    %c0_36 = arith.constant 0 : index
    %194 = vector.load %arg2[%c0_35, %c0_36] : memref<2x1xf32, #tpu.memory_space<vmem>>, vector<2x1xf32>
    tpu.vector_store %arg2[%c0_35, %c0_36], %193 {strides = array<i32>} : memref<2x1xf32, #tpu.memory_space<vmem>>, vector<2x1xf32>,
    return
  }
}

</mosaic_0001>

<llo_original>
// kernel: tpu_custom_call.1
$region0: #{tpu_custom_call.1}
  #allocation0 [shape = 'u32[]', space=smem, size = 0x4, offset = 0x4, fixed_abs, tag = 'smem constant byte address 0x4 - core index']
  #allocation1 [shape = 'u32[144,128]{1,0:T(1,128)}', space=vmem, size = 0x12000, scoped, tag = 'internal scratch']
  %s0 = inlined_call_operand.vmem [shape: f32[16,4], index: 0, kind: input, shape index: {}]
  %s1 = inlined_call_operand.hbm [shape: f32[32,128], index: 1, kind: input, shape index: {}]
  %s2 = inlined_call_operand.vmem [shape: f32[2,1], index: 2, kind: output, shape index: {}]
  %s3 = sld [smem:[#allocation0]]
  $region22: #{tpu_custom_call.1} parent=0
    _
  %s5 = ssub.s32 1, %s3
  %s6 = scalar_select 0, %s5, %s3
  $region1: #{tpu_custom_call.1} parent=0
    #allocation2 [shape = 'u8[16384]{0}', space=vmem, size = 0x4000, scoped, tag = 'input window, operand 1, single buffered']
    #allocation3 [shape = 's32[1]{0}', space=sflag, size = 0x4, scoped, tag = 'scoped memory for tpu_custom_call.1']
    %7 = vsyncpa [#allocation3], 0
    // Predicated region
    $region2: #{tpu_custom_call.1} parent=1 // pred_check
      _
    $region3: #{tpu_custom_call.1} parent=1 // pred_check_branch
      %9 = sbr.rel (0) target = $region5
    $region4: #{tpu_custom_call.1} parent=1 // pred_region
      _
    $region5: #{tpu_custom_call.1} parent=1 // pred_fallthru
      _
    // Predicated region
    $region6: #{tpu_custom_call.1} parent=1 // pred_check
      _
    $region7: #{tpu_custom_call.1} parent=1 // pred_check_branch
      %11 = sbr.rel (0) target = $region9
    $region8: #{tpu_custom_call.1} parent=1 // pred_region
      %s13 = ssub.s32 512, 512
      %14 = vsyncadd [#allocation3], %s13
      %s15 = sshll.u32 [#allocation2], 4
      %s16 = int_to_ptr.vmem [resolvable:$true] %s15
      %21 = dma.hbm_to_vmem [thread:$0]  %s1, 512, %s16, [#allocation3], 128, 128, 8
    $region9: #{tpu_custom_call.1} parent=1 // pred_fallthru
      _
    // Predicated region
    $region10: #{tpu_custom_call.1} parent=1 // pred_check
      _
    $region11: #{tpu_custom_call.1} parent=1 // pred_check_branch
      %23 = sbr.rel (0) target = $region13
    $region12: #{tpu_custom_call.1} parent=1 // pred_region
      %24 = dma.done [#allocation3], 512
    $region13: #{tpu_custom_call.1} parent=1 // pred_fallthru
      _
    %v25 = vld [vmem:[#allocation2] sm:$0xff]
    %v26 = vld [vmem:[#allocation2 + $0x8] sm:$0xff]
    %v27 = vld [vmem:[#allocation2 + $0x10] sm:$0xff]
    %v28 = vld [vmem:[#allocation2 + $0x18] sm:$0xff]
    %v29 = vld [vmem:[#allocation2] sm:$0xf]
    %v30 = vld [vmem:[#allocation2 + $0x8] sm:$0xff]
    %v31 = vld [vmem:[#allocation2 + $0x10] sm:$0x1]
    %v32 = vld [vmem:[#allocation2 + $0x18] sm:$0x1]
    %v33 = vld [vmem:[%s0] sm:$0xff]
    %v34 = vld [vmem:[%s0 + $0x8] sm:$0xff]
    %vm35 = vcmask 31744
    %v36 = vsel %vm35, %v33, 0.0
    %v37 = vsel %vm35, %v34, 0.0
    %v38 = vadd.f32 %v36, %v37
    %v39 = vrot.slane %v38, 4
    %v40 = vadd.f32 %v38, %v39
    %v41 = vrot.slane %v40, 2
    %v42 = vadd.f32 %v40, %v41
    %v43 = vrot.slane %v42, 1
    %v44 = vadd.f32 %v42, %v43
    %v45 = vrcp.pop 16.0
    %v46 = vmul.f32 %v44, %v45
    %v47 = vsub.f32 %v33, %v46
    %v48 = vsub.f32 %v34, %v46
    %v49 = vmul.f32 %v47, %v47
    %v50 = vmul.f32 %v48, %v48
    %v51 = vsel %vm35, %v49, 0.0
    %v52 = vsel %vm35, %v50, 0.0
    %v53 = vadd.f32 %v51, %v52
    %v54 = vrot.slane %v53, 4
    %v55 = vadd.f32 %v53, %v54
    %v56 = vrot.slane %v55, 2
    %v57 = vadd.f32 %v55, %v56
    %v58 = vrot.slane %v57, 1
    %v59 = vadd.f32 %v57, %v58
    %v60 = vmul.f32 %v59, %v45
    %v61 = vadd.f32 %v60, 1e-05
    %v62 = vrsqrt.pop %v61
    %64 = vrot.lane.b32.xlu0 %v32, 64
    %v65 = vpop.permute.xlu0 %64
    %v67 = vmul.f32 %v62, %v65
    %v68 = vlaneseq
    %v69 = vshrl.u32 %v68, 7
    %v70 = vsub.s32 0, %v69
    %v71 = vrot.slane %v67, %v70
    %v72 = vmul.f32 %v47, %v71
    %v73 = vmul.f32 %v48, %v71
    %v74 = vlaneseq
    %v75 = vshrl.u32 %v74, 7
    %v76 = vsub.s32 0, %v75
    %v77 = vrot.slane %v32, %v76
    %79 = vrot.lane.b32.xlu0 %v77, 60
    %v80 = vpop.permute.xlu0 %79
    %v82 = vadd.f32 %v72, %v80
    %v83 = vadd.f32 %v73, %v80
    %85 = vrot.lane.b32.xlu0 %v29, 64
    %v86 = vpop.permute.xlu0 %85
    %v88 = vsel %vm35, %v82, 0
    %v91 = vsel %vm35, %v83, 0
    %vm93 = vcmask 1043456
    %v94 = vsel %vm93, %v86, 0
    %96 = vmatprep.subr.mxu0 0.0
    %97 = vmatpush1.msra.mxu0 %v94
    %98 = vmatprep.subr.mxu0 0.0
    %99 = vmatpush1.msra.mxu0 0.0
    %100 = vmatprep.subr.mxu0 0.0
    %101 = vmatpush1.msra.mxu0 0.0
    %102 = vmatprep.subr.mxu0 0.0
    %103 = vmatpush1.msra.mxu0 0.0
    %104 = vmatprep.subr.mxu0 0.0
    %105 = vmatpush1.msra.mxu0 0.0
    %106 = vmatprep.subr.mxu0 0.0
    %107 = vmatpush1.msra.mxu0 0.0
    %108 = vmatprep.subr.mxu0 0.0
    %109 = vmatpush1.msra.mxu0 0.0
    %110 = vmatprep.subr.mxu0 0.0
    %111 = vmatpush1.msra.mxu0 0.0
    %112 = vmatprep.subr.mxu0 0.0
    %113 = vmatpush1.msra.mxu0 0.0
    %114 = vmatprep.subr.mxu0 0.0
    %115 = vmatpush1.msra.mxu0 0.0
    %116 = vmatprep.subr.mxu0 0.0
    %117 = vmatpush1.msra.mxu0 0.0
    %118 = vmatprep.subr.mxu0 0.0
    %119 = vmatpush1.msra.mxu0 0.0
    %120 = vmatprep.subr.mxu0 0.0
    %121 = vmatpush1.msra.mxu0 0.0
    %122 = vmatprep.subr.mxu0 0.0
    %123 = vmatpush1.msra.mxu0 0.0
    %124 = vmatprep.subr.mxu0 0.0
    %125 = vmatpush1.msra.mxu0 0.0
    %126 = vmatprep.subr.mxu0 0.0
    %127 = vmatpush1.msra.mxu0 0.0
    %128 = vmatprep.subr.mxu0 0.0
    %129 = vmatpush1.msra.mxu0 0.0
    %130 = vmatprep.subr.mxu0 0.0
    %131 = vmatpush1.msra.mxu0 0.0
    %132 = vmatprep.subr.mxu0 0.0
    %133 = vmatpush1.msra.mxu0 0.0
    %134 = vmatprep.subr.mxu0 0.0
    %135 = vmatpush1.msra.mxu0 0.0
    %136 = vmatprep.subr.mxu0 0.0
    %137 = vmatpush1.msra.mxu0 0.0
    %138 = vmatprep.subr.mxu0 0.0
    %139 = vmatpush1.msra.mxu0 0.0
    %140 = vmatprep.subr.mxu0 0.0
    %141 = vmatpush1.msra.mxu0 0.0
    %142 = vmatprep.subr.mxu0 0.0
    %143 = vmatpush1.msra.mxu0 0.0
    %144 = vmatprep.subr.mxu0 0.0
    %145 = vmatpush1.msra.mxu0 0.0
    %146 = vmatprep.subr.mxu0 0.0
    %147 = vmatpush1.msra.mxu0 0.0
    %148 = vmatprep.subr.mxu0 0.0
    %149 = vmatpush1.msra.mxu0 0.0
    %150 = vmatprep.subr.mxu0 0.0
    %151 = vmatpush1.msra.mxu0 0.0
    %152 = vmatprep.subr.mxu0 0.0
    %153 = vmatpush1.msra.mxu0 0.0
    %154 = vmatprep.subr.mxu0 0.0
    %155 = vmatpush1.msra.mxu0 0.0
    %156 = vmatprep.subr.mxu0 0.0
    %157 = vmatpush1.msra.mxu0 0.0
    %158 = vmatprep.subr.mxu0 0.0
    %159 = vmatpush1.msra.mxu0 0.0
    %160 = vmatprep.mubr.f32.mxu0 0.0
    %161 = vmatmul.mubr.f32.gmra.mrb[0].mxu0 %v88
    %v162 = vpop.f32.mrb[0].mxu0
    %v163 = vadd.f32 0.0, %v162
    %v164 = vpop.f32.mrb[0].mxu0
    %165 = vmatprep.mubr.f32.mxu0 0.0
    %166 = vmatmul.mubr.f32.gmra.mrb[0].mxu0 %v91
    %v167 = vpop.f32.mrb[0].mxu0
    %v168 = vadd.f32 0.0, %v167
    %v169 = vpop.f32.mrb[0].mxu0
    %170 = vdwg.mxu0
    %v171 = vlaneseq
    %v172 = vshrl.u32 %v171, 7
    %v173 = vsub.s32 0, %v172
    %v174 = vrot.slane %v31, %v173
    %176 = vrot.lane.b32.xlu0 %v174, 64
    %v177 = vpop.permute.xlu0 %176
    %v179 = vadd.f32 %v163, %v177
    %v180 = vadd.f32 %v168, %v177
    %v181 = vtanh.pop %v179
    %v182 = vtanh.pop %v180
    %v183 = vlaneseq
    %v184 = vshrl.u32 %v183, 7
    %v185 = vsub.s32 0, %v184
    %v186 = vrot.slane %v30, %v185
    %188 = vrot.lane.b32.xlu0 %v186, 64
    %v189 = vpop.permute.xlu0 %188
    %v191 = vmul.f32 %v181, %v189
    %v192 = vadd.f32 %v191, 0.0
    %v193 = vlaneseq
    %v194 = vshrl.u32 %v193, 7
    %v195 = vsub.s32 7, %v194
    %v196 = vrot.slane %v30, %v195
    %198 = vrot.lane.b32.xlu0 %v196, 64
    %v199 = vpop.permute.xlu0 %198
    %v201 = vmul.f32 %v182, %v199
    %v202 = vadd.f32 %v201, 0.0
    %vm203 = vcmask 261120
    %v205 = vsel %vm203, %v181, 0
    %207 = vmatprep.subr.mxu0 0.0
    %208 = vmatpush1.msra.mxu0 %v25
    %209 = vmatprep.subr.mxu0 0.0
    %210 = vmatpush1.msra.mxu0 %v26
    %211 = vmatprep.subr.mxu0 0.0
    %212 = vmatpush1.msra.mxu0 %v27
    %213 = vmatprep.subr.mxu0 0.0
    %214 = vmatpush1.msra.mxu0 %v28
    %215 = vmatprep.subr.mxu0 0.0
    %216 = vmatpush1.msra.mxu0 0.0
    %217 = vmatprep.subr.mxu0 0.0
    %218 = vmatpush1.msra.mxu0 0.0
    %219 = vmatprep.subr.mxu0 0.0
    %220 = vmatpush1.msra.mxu0 0.0
    %221 = vmatprep.subr.mxu0 0.0
    %222 = vmatpush1.msra.mxu0 0.0
    %223 = vmatprep.subr.mxu0 0.0
    %224 = vmatpush1.msra.mxu0 0.0
    %225 = vmatprep.subr.mxu0 0.0
    %226 = vmatpush1.msra.mxu0 0.0
    %227 = vmatprep.subr.mxu0 0.0
    %228 = vmatpush1.msra.mxu0 0.0
    %229 = vmatprep.subr.mxu0 0.0
    %230 = vmatpush1.msra.mxu0 0.0
    %231 = vmatprep.subr.mxu0 0.0
    %232 = vmatpush1.msra.mxu0 0.0
    %233 = vmatprep.subr.mxu0 0.0
    %234 = vmatpush1.msra.mxu0 0.0
    %235 = vmatprep.subr.mxu0 0.0
    %236 = vmatpush1.msra.mxu0 0.0
    %237 = vmatprep.subr.mxu0 0.0
    %238 = vmatpush1.msra.mxu0 0.0
    %239 = vmatprep.subr.mxu0 0.0
    %240 = vmatpush1.msra.mxu0 0.0
    %241 = vmatprep.subr.mxu0 0.0
    %242 = vmatpush1.msra.mxu0 0.0
    %243 = vmatprep.subr.mxu0 0.0
    %244 = vmatpush1.msra.mxu0 0.0
    %245 = vmatprep.subr.mxu0 0.0
    %246 = vmatpush1.msra.mxu0 0.0
    %247 = vmatprep.subr.mxu0 0.0
    %248 = vmatpush1.msra.mxu0 0.0
    %249 = vmatprep.subr.mxu0 0.0
    %250 = vmatpush1.msra.mxu0 0.0
    %251 = vmatprep.subr.mxu0 0.0
    %252 = vmatpush1.msra.mxu0 0.0
    %253 = vmatprep.subr.mxu0 0.0
    %254 = vmatpush1.msra.mxu0 0.0
    %255 = vmatprep.subr.mxu0 0.0
    %256 = vmatpush1.msra.mxu0 0.0
    %257 = vmatprep.subr.mxu0 0.0
    %258 = vmatpush1.msra.mxu0 0.0
    %259 = vmatprep.subr.mxu0 0.0
    %260 = vmatpush1.msra.mxu0 0.0
    %261 = vmatprep.subr.mxu0 0.0
    %262 = vmatpush1.msra.mxu0 0.0
    %263 = vmatprep.subr.mxu0 0.0
    %264 = vmatpush1.msra.mxu0 0.0
    %265 = vmatprep.subr.mxu0 0.0
    %266 = vmatpush1.msra.mxu0 0.0
    %267 = vmatprep.subr.mxu0 0.0
    %268 = vmatpush1.msra.mxu0 0.0
    %269 = vmatprep.subr.mxu0 0.0
    %270 = vmatpush1.msra.mxu0 0.0
    %271 = vmatprep.mubr.f32.mxu0 0.0
    %272 = vmatmul.mubr.f32.gmra.mrb[0].mxu0 %v205
    %v273 = vpop.f32.mrb[0].mxu0
    %v274 = vadd.f32 0.0, %v273
    %v275 = vpop.f32.mrb[0].mxu0
    %276 = vdwg.mxu0
    %v278 = vrot.slane %v274, 6
    %v280 = vadd.f32 %v179, %v278
    %v282 = vrot.slane %v182, 6
    %283 = vrot.lane.b32.xlu0 %v282, 96
    %v284 = vpop.permute.xlu0 %283
    %289 = vrot.lane.b32.xlu0 %v25, 96
    %v290 = vpop.permute.xlu0 %289
    %291 = vrot.lane.b32.xlu0 %v26, 96
    %v292 = vpop.permute.xlu0 %291
    %293 = vrot.lane.b32.xlu0 %v27, 96
    %v294 = vpop.permute.xlu0 %293
    %295 = vrot.lane.b32.xlu0 %v28, 96
    %v296 = vpop.permute.xlu0 %295
    %v301 = vsel %vm203, %v284, 0
    %303 = vmatprep.subr.mxu0 0.0
    %304 = vmatpush1.msra.mxu0 %v290
    %305 = vmatprep.subr.mxu0 0.0
    %306 = vmatpush1.msra.mxu0 %v292
    %307 = vmatprep.subr.mxu0 0.0
    %308 = vmatpush1.msra.mxu0 %v294
    %309 = vmatprep.subr.mxu0 0.0
    %310 = vmatpush1.msra.mxu0 %v296
    %311 = vmatprep.subr.mxu0 0.0
    %312 = vmatpush1.msra.mxu0 0.0
    %313 = vmatprep.subr.mxu0 0.0
    %314 = vmatpush1.msra.mxu0 0.0
    %315 = vmatprep.subr.mxu0 0.0
    %316 = vmatpush1.msra.mxu0 0.0
    %317 = vmatprep.subr.mxu0 0.0
    %318 = vmatpush1.msra.mxu0 0.0
    %319 = vmatprep.subr.mxu0 0.0
    %320 = vmatpush1.msra.mxu0 0.0
    %321 = vmatprep.subr.mxu0 0.0
    %322 = vmatpush1.msra.mxu0 0.0
    %323 = vmatprep.subr.mxu0 0.0
    %324 = vmatpush1.msra.mxu0 0.0
    %325 = vmatprep.subr.mxu0 0.0
    %326 = vmatpush1.msra.mxu0 0.0
    %327 = vmatprep.subr.mxu0 0.0
    %328 = vmatpush1.msra.mxu0 0.0
    %329 = vmatprep.subr.mxu0 0.0
    %330 = vmatpush1.msra.mxu0 0.0
    %331 = vmatprep.subr.mxu0 0.0
    %332 = vmatpush1.msra.mxu0 0.0
    %333 = vmatprep.subr.mxu0 0.0
    %334 = vmatpush1.msra.mxu0 0.0
    %335 = vmatprep.subr.mxu0 0.0
    %336 = vmatpush1.msra.mxu0 0.0
    %337 = vmatprep.subr.mxu0 0.0
    %338 = vmatpush1.msra.mxu0 0.0
    %339 = vmatprep.subr.mxu0 0.0
    %340 = vmatpush1.msra.mxu0 0.0
    %341 = vmatprep.subr.mxu0 0.0
    %342 = vmatpush1.msra.mxu0 0.0
    %343 = vmatprep.subr.mxu0 0.0
    %344 = vmatpush1.msra.mxu0 0.0
    %345 = vmatprep.subr.mxu0 0.0
    %346 = vmatpush1.msra.mxu0 0.0
    %347 = vmatprep.subr.mxu0 0.0
    %348 = vmatpush1.msra.mxu0 0.0
    %349 = vmatprep.subr.mxu0 0.0
    %350 = vmatpush1.msra.mxu0 0.0
    %351 = vmatprep.subr.mxu0 0.0
    %352 = vmatpush1.msra.mxu0 0.0
    %353 = vmatprep.subr.mxu0 0.0
    %354 = vmatpush1.msra.mxu0 0.0
    %355 = vmatprep.subr.mxu0 0.0
    %356 = vmatpush1.msra.mxu0 0.0
    %357 = vmatprep.subr.mxu0 0.0
    %358 = vmatpush1.msra.mxu0 0.0
    %359 = vmatprep.subr.mxu0 0.0
    %360 = vmatpush1.msra.mxu0 0.0
    %361 = vmatprep.subr.mxu0 0.0
    %362 = vmatpush1.msra.mxu0 0.0
    %363 = vmatprep.subr.mxu0 0.0
    %364 = vmatpush1.msra.mxu0 0.0
    %365 = vmatprep.subr.mxu0 0.0
    %366 = vmatpush1.msra.mxu0 0.0
    %367 = vmatprep.mubr.f32.mxu0 0.0
    %368 = vmatmul.mubr.f32.gmra.mrb[0].mxu0 %v301
    %v369 = vpop.f32.mrb[0].mxu0
    %v370 = vadd.f32 0.0, %v369
    %v371 = vpop.f32.mrb[0].mxu0
    %372 = vdwg.mxu0
    %v374 = vrot.slane %v370, 4
    %375 = vrot.lane.b32.xlu0 %v374, 32
    %v376 = vpop.permute.xlu0 %375
    %v378 = vadd.f32 %v180, %v376
    %v379 = vtanh.pop %v280
    %v380 = vtanh.pop %v378
    %v381 = vlaneseq
    %v382 = vshrl.u32 %v381, 7
    %v383 = vsub.s32 1, %v382
    %v384 = vrot.slane %v30, %v383
    %386 = vrot.lane.b32.xlu0 %v384, 64
    %v387 = vpop.permute.xlu0 %386
    %v389 = vmul.f32 %v379, %v387
    %v391 = vrot.slane %v389, 2
    %v393 = vadd.f32 %v192, %v391
    %v394 = vlaneseq
    %v395 = vshrl.u32 %v394, 7
    %v396 = vsub.s32 6, %v395
    %v397 = vrot.slane %v30, %v396
    %399 = vrot.lane.b32.xlu0 %v397, 64
    %v400 = vpop.permute.xlu0 %399
    %v402 = vmul.f32 %v380, %v400
    %v404 = vrot.slane %v402, 6
    %v406 = vadd.f32 %v202, %v404
    %v408 = vrot.slane %v379, 2
    %v409 = vsel %vm203, %v408, 0
    %411 = vmatprep.subr.mxu0 0.0
    %412 = vmatpush1.msra.mxu0 %v25
    %413 = vmatprep.subr.mxu0 0.0
    %414 = vmatpush1.msra.mxu0 %v26
    %415 = vmatprep.subr.mxu0 0.0
    %416 = vmatpush1.msra.mxu0 %v27
    %417 = vmatprep.subr.mxu0 0.0
    %418 = vmatpush1.msra.mxu0 %v28
    %419 = vmatprep.subr.mxu0 0.0
    %420 = vmatpush1.msra.mxu0 0.0
    %421 = vmatprep.subr.mxu0 0.0
    %422 = vmatpush1.msra.mxu0 0.0
    %423 = vmatprep.subr.mxu0 0.0
    %424 = vmatpush1.msra.mxu0 0.0
    %425 = vmatprep.subr.mxu0 0.0
    %426 = vmatpush1.msra.mxu0 0.0
    %427 = vmatprep.subr.mxu0 0.0
    %428 = vmatpush1.msra.mxu0 0.0
    %429 = vmatprep.subr.mxu0 0.0
    %430 = vmatpush1.msra.mxu0 0.0
    %431 = vmatprep.subr.mxu0 0.0
    %432 = vmatpush1.msra.mxu0 0.0
    %433 = vmatprep.subr.mxu0 0.0
    %434 = vmatpush1.msra.mxu0 0.0
    %435 = vmatprep.subr.mxu0 0.0
    %436 = vmatpush1.msra.mxu0 0.0
    %437 = vmatprep.subr.mxu0 0.0
    %438 = vmatpush1.msra.mxu0 0.0
    %439 = vmatprep.subr.mxu0 0.0
    %440 = vmatpush1.msra.mxu0 0.0
    %441 = vmatprep.subr.mxu0 0.0
    %442 = vmatpush1.msra.mxu0 0.0
    %443 = vmatprep.subr.mxu0 0.0
    %444 = vmatpush1.msra.mxu0 0.0
    %445 = vmatprep.subr.mxu0 0.0
    %446 = vmatpush1.msra.mxu0 0.0
    %447 = vmatprep.subr.mxu0 0.0
    %448 = vmatpush1.msra.mxu0 0.0
    %449 = vmatprep.subr.mxu0 0.0
    %450 = vmatpush1.msra.mxu0 0.0
    %451 = vmatprep.subr.mxu0 0.0
    %452 = vmatpush1.msra.mxu0 0.0
    %453 = vmatprep.subr.mxu0 0.0
    %454 = vmatpush1.msra.mxu0 0.0
    %455 = vmatprep.subr.mxu0 0.0
    %456 = vmatpush1.msra.mxu0 0.0
    %457 = vmatprep.subr.mxu0 0.0
    %458 = vmatpush1.msra.mxu0 0.0
    %459 = vmatprep.subr.mxu0 0.0
    %460 = vmatpush1.msra.mxu0 0.0
    %461 = vmatprep.subr.mxu0 0.0
    %462 = vmatpush1.msra.mxu0 0.0
    %463 = vmatprep.subr.mxu0 0.0
    %464 = vmatpush1.msra.mxu0 0.0
    %465 = vmatprep.subr.mxu0 0.0
    %466 = vmatpush1.msra.mxu0 0.0
    %467 = vmatprep.subr.mxu0 0.0
    %468 = vmatpush1.msra.mxu0 0.0
    %469 = vmatprep.subr.mxu0 0.0
    %470 = vmatpush1.msra.mxu0 0.0
    %471 = vmatprep.subr.mxu0 0.0
    %472 = vmatpush1.msra.mxu0 0.0
    %473 = vmatprep.subr.mxu0 0.0
    %474 = vmatpush1.msra.mxu0 0.0
    %475 = vmatprep.mubr.f32.mxu0 0.0
    %476 = vmatmul.mubr.f32.gmra.mrb[0].mxu0 %v409
    %v477 = vpop.f32.mrb[0].mxu0
    %v478 = vadd.f32 0.0, %v477
    %v479 = vpop.f32.mrb[0].mxu0
    %480 = vdwg.mxu0
    %v482 = vrot.slane %v478, 4
    %v484 = vadd.f32 %v179, %v482
    %v486 = vrot.slane %v380, 4
    %487 = vrot.lane.b32.xlu0 %v486, 96
    %v488 = vpop.permute.xlu0 %487
    %v489 = vsel %vm203, %v488, 0
    %491 = vmatprep.subr.mxu0 0.0
    %492 = vmatpush1.msra.mxu0 %v290
    %493 = vmatprep.subr.mxu0 0.0
    %494 = vmatpush1.msra.mxu0 %v292
    %495 = vmatprep.subr.mxu0 0.0
    %496 = vmatpush1.msra.mxu0 %v294
    %497 = vmatprep.subr.mxu0 0.0
    %498 = vmatpush1.msra.mxu0 %v296
    %499 = vmatprep.subr.mxu0 0.0
    %500 = vmatpush1.msra.mxu0 0.0
    %501 = vmatprep.subr.mxu0 0.0
    %502 = vmatpush1.msra.mxu0 0.0
    %503 = vmatprep.subr.mxu0 0.0
    %504 = vmatpush1.msra.mxu0 0.0
    %505 = vmatprep.subr.mxu0 0.0
    %506 = vmatpush1.msra.mxu0 0.0
    %507 = vmatprep.subr.mxu0 0.0
    %508 = vmatpush1.msra.mxu0 0.0
    %509 = vmatprep.subr.mxu0 0.0
    %510 = vmatpush1.msra.mxu0 0.0
    %511 = vmatprep.subr.mxu0 0.0
    %512 = vmatpush1.msra.mxu0 0.0
    %513 = vmatprep.subr.mxu0 0.0
    %514 = vmatpush1.msra.mxu0 0.0
    %515 = vmatprep.subr.mxu0 0.0
    %516 = vmatpush1.msra.mxu0 0.0
    %517 = vmatprep.subr.mxu0 0.0
    %518 = vmatpush1.msra.mxu0 0.0
    %519 = vmatprep.subr.mxu0 0.0
    %520 = vmatpush1.msra.mxu0 0.0
    %521 = vmatprep.subr.mxu0 0.0
    %522 = vmatpush1.msra.mxu0 0.0
    %523 = vmatprep.subr.mxu0 0.0
    %524 = vmatpush1.msra.mxu0 0.0
    %525 = vmatprep.subr.mxu0 0.0
    %526 = vmatpush1.msra.mxu0 0.0
    %527 = vmatprep.subr.mxu0 0.0
    %528 = vmatpush1.msra.mxu0 0.0
    %529 = vmatprep.subr.mxu0 0.0
    %530 = vmatpush1.msra.mxu0 0.0
    %531 = vmatprep.subr.mxu0 0.0
    %532 = vmatpush1.msra.mxu0 0.0
    %533 = vmatprep.subr.mxu0 0.0
    %534 = vmatpush1.msra.mxu0 0.0
    %535 = vmatprep.subr.mxu0 0.0
    %536 = vmatpush1.msra.mxu0 0.0
    %537 = vmatprep.subr.mxu0 0.0
    %538 = vmatpush1.msra.mxu0 0.0
    %539 = vmatprep.subr.mxu0 0.0
    %540 = vmatpush1.msra.mxu0 0.0
    %541 = vmatprep.subr.mxu0 0.0
    %542 = vmatpush1.msra.mxu0 0.0
    %543 = vmatprep.subr.mxu0 0.0
    %544 = vmatpush1.msra.mxu0 0.0
    %545 = vmatprep.subr.mxu0 0.0
    %546 = vmatpush1.msra.mxu0 0.0
    %547 = vmatprep.subr.mxu0 0.0
    %548 = vmatpush1.msra.mxu0 0.0
    %549 = vmatprep.subr.mxu0 0.0
    %550 = vmatpush1.msra.mxu0 0.0
    %551 = vmatprep.subr.mxu0 0.0
    %552 = vmatpush1.msra.mxu0 0.0
    %553 = vmatprep.subr.mxu0 0.0
    %554 = vmatpush1.msra.mxu0 0.0
    %555 = vmatprep.mubr.f32.mxu0 0.0
    %556 = vmatmul.mubr.f32.gmra.mrb[0].mxu0 %v489
    %v557 = vpop.f32.mrb[0].mxu0
    %v558 = vadd.f32 0.0, %v557
    %v559 = vpop.f32.mrb[0].mxu0
    %560 = vdwg.mxu0
    %v562 = vrot.slane %v558, 6
    %563 = vrot.lane.b32.xlu0 %v562, 32
    %v564 = vpop.permute.xlu0 %563
    %v566 = vadd.f32 %v180, %v564
    %v567 = vtanh.pop %v484
    %v568 = vtanh.pop %v566
    %v569 = vlaneseq
    %v570 = vshrl.u32 %v569, 7
    %v571 = vsub.s32 2, %v570
    %v572 = vrot.slane %v30, %v571
    %574 = vrot.lane.b32.xlu0 %v572, 64
    %v575 = vpop.permute.xlu0 %574
    %v577 = vmul.f32 %v567, %v575
    %v579 = vrot.slane %v577, 4
    %v581 = vadd.f32 %v393, %v579
    %v582 = vlaneseq
    %v583 = vshrl.u32 %v582, 7
    %v584 = vsub.s32 5, %v583
    %v585 = vrot.slane %v30, %v584
    %587 = vrot.lane.b32.xlu0 %v585, 64
    %v588 = vpop.permute.xlu0 %587
    %v590 = vmul.f32 %v568, %v588
    %v592 = vrot.slane %v590, 4
    %v594 = vadd.f32 %v406, %v592
    %v596 = vrot.slane %v567, 4
    %v597 = vsel %vm203, %v596, 0
    %599 = vmatprep.subr.mxu0 0.0
    %600 = vmatpush1.msra.mxu0 %v25
    %601 = vmatprep.subr.mxu0 0.0
    %602 = vmatpush1.msra.mxu0 %v26
    %603 = vmatprep.subr.mxu0 0.0
    %604 = vmatpush1.msra.mxu0 %v27
    %605 = vmatprep.subr.mxu0 0.0
    %606 = vmatpush1.msra.mxu0 %v28
    %607 = vmatprep.subr.mxu0 0.0
    %608 = vmatpush1.msra.mxu0 0.0
    %609 = vmatprep.subr.mxu0 0.0
    %610 = vmatpush1.msra.mxu0 0.0
    %611 = vmatprep.subr.mxu0 0.0
    %612 = vmatpush1.msra.mxu0 0.0
    %613 = vmatprep.subr.mxu0 0.0
    %614 = vmatpush1.msra.mxu0 0.0
    %615 = vmatprep.subr.mxu0 0.0
    %616 = vmatpush1.msra.mxu0 0.0
    %617 = vmatprep.subr.mxu0 0.0
    %618 = vmatpush1.msra.mxu0 0.0
    %619 = vmatprep.subr.mxu0 0.0
    %620 = vmatpush1.msra.mxu0 0.0
    %621 = vmatprep.subr.mxu0 0.0
    %622 = vmatpush1.msra.mxu0 0.0
    %623 = vmatprep.subr.mxu0 0.0
    %624 = vmatpush1.msra.mxu0 0.0
    %625 = vmatprep.subr.mxu0 0.0
    %626 = vmatpush1.msra.mxu0 0.0
    %627 = vmatprep.subr.mxu0 0.0
    %628 = vmatpush1.msra.mxu0 0.0
    %629 = vmatprep.subr.mxu0 0.0
    %630 = vmatpush1.msra.mxu0 0.0
    %631 = vmatprep.subr.mxu0 0.0
    %632 = vmatpush1.msra.mxu0 0.0
    %633 = vmatprep.subr.mxu0 0.0
    %634 = vmatpush1.msra.mxu0 0.0
    %635 = vmatprep.subr.mxu0 0.0
    %636 = vmatpush1.msra.mxu0 0.0
    %637 = vmatprep.subr.mxu0 0.0
    %638 = vmatpush1.msra.mxu0 0.0
    %639 = vmatprep.subr.mxu0 0.0
    %640 = vmatpush1.msra.mxu0 0.0
    %641 = vmatprep.subr.mxu0 0.0
    %642 = vmatpush1.msra.mxu0 0.0
    %643 = vmatprep.subr.mxu0 0.0
    %644 = vmatpush1.msra.mxu0 0.0
    %645 = vmatprep.subr.mxu0 0.0
    %646 = vmatpush1.msra.mxu0 0.0
    %647 = vmatprep.subr.mxu0 0.0
    %648 = vmatpush1.msra.mxu0 0.0
    %649 = vmatprep.subr.mxu0 0.0
    %650 = vmatpush1.msra.mxu0 0.0
    %651 = vmatprep.subr.mxu0 0.0
    %652 = vmatpush1.msra.mxu0 0.0
    %653 = vmatprep.subr.mxu0 0.0
    %654 = vmatpush1.msra.mxu0 0.0
    %655 = vmatprep.subr.mxu0 0.0
    %656 = vmatpush1.msra.mxu0 0.0
    %657 = vmatprep.subr.mxu0 0.0
    %658 = vmatpush1.msra.mxu0 0.0
    %659 = vmatprep.subr.mxu0 0.0
    %660 = vmatpush1.msra.mxu0 0.0
    %661 = vmatprep.subr.mxu0 0.0
    %662 = vmatpush1.msra.mxu0 0.0
    %663 = vmatprep.mubr.f32.mxu0 0.0
    %664 = vmatmul.mubr.f32.gmra.mrb[0].mxu0 %v597
    %v665 = vpop.f32.mrb[0].mxu0
    %v666 = vadd.f32 0.0, %v665
    %v667 = vpop.f32.mrb[0].mxu0
    %668 = vdwg.mxu0
    %v670 = vrot.slane %v666, 2
    %v672 = vadd.f32 %v179, %v670
    %v674 = vrot.slane %v568, 2
    %675 = vrot.lane.b32.xlu0 %v674, 96
    %v676 = vpop.permute.xlu0 %675
    %v677 = vsel %vm203, %v676, 0
    %679 = vmatprep.subr.mxu0 0.0
    %680 = vmatpush1.msra.mxu0 %v290
    %681 = vmatprep.subr.mxu0 0.0
    %682 = vmatpush1.msra.mxu0 %v292
    %683 = vmatprep.subr.mxu0 0.0
    %684 = vmatpush1.msra.mxu0 %v294
    %685 = vmatprep.subr.mxu0 0.0
    %686 = vmatpush1.msra.mxu0 %v296
    %687 = vmatprep.subr.mxu0 0.0
    %688 = vmatpush1.msra.mxu0 0.0
    %689 = vmatprep.subr.mxu0 0.0
    %690 = vmatpush1.msra.mxu0 0.0
    %691 = vmatprep.subr.mxu0 0.0
    %692 = vmatpush1.msra.mxu0 0.0
    %693 = vmatprep.subr.mxu0 0.0
    %694 = vmatpush1.msra.mxu0 0.0
    %695 = vmatprep.subr.mxu0 0.0
    %696 = vmatpush1.msra.mxu0 0.0
    %697 = vmatprep.subr.mxu0 0.0
    %698 = vmatpush1.msra.mxu0 0.0
    %699 = vmatprep.subr.mxu0 0.0
    %700 = vmatpush1.msra.mxu0 0.0
    %701 = vmatprep.subr.mxu0 0.0
    %702 = vmatpush1.msra.mxu0 0.0
    %703 = vmatprep.subr.mxu0 0.0
    %704 = vmatpush1.msra.mxu0 0.0
    %705 = vmatprep.subr.mxu0 0.0
    %706 = vmatpush1.msra.mxu0 0.0
    %707 = vmatprep.subr.mxu0 0.0
    %708 = vmatpush1.msra.mxu0 0.0
    %709 = vmatprep.subr.mxu0 0.0
    %710 = vmatpush1.msra.mxu0 0.0
    %711 = vmatprep.subr.mxu0 0.0
    %712 = vmatpush1.msra.mxu0 0.0
    %713 = vmatprep.subr.mxu0 0.0
    %714 = vmatpush1.msra.mxu0 0.0
    %715 = vmatprep.subr.mxu0 0.0
    %716 = vmatpush1.msra.mxu0 0.0
    %717 = vmatprep.subr.mxu0 0.0
    %718 = vmatpush1.msra.mxu0 0.0
    %719 = vmatprep.subr.mxu0 0.0
    %720 = vmatpush1.msra.mxu0 0.0
    %721 = vmatprep.subr.mxu0 0.0
    %722 = vmatpush1.msra.mxu0 0.0
    %723 = vmatprep.subr.mxu0 0.0
    %724 = vmatpush1.msra.mxu0 0.0
    %725 = vmatprep.subr.mxu0 0.0
    %726 = vmatpush1.msra.mxu0 0.0
    %727 = vmatprep.subr.mxu0 0.0
    %728 = vmatpush1.msra.mxu0 0.0
    %729 = vmatprep.subr.mxu0 0.0
    %730 = vmatpush1.msra.mxu0 0.0
    %731 = vmatprep.subr.mxu0 0.0
    %732 = vmatpush1.msra.mxu0 0.0
    %733 = vmatprep.subr.mxu0 0.0
    %734 = vmatpush1.msra.mxu0 0.0
    %735 = vmatprep.subr.mxu0 0.0
    %736 = vmatpush1.msra.mxu0 0.0
    %737 = vmatprep.subr.mxu0 0.0
    %738 = vmatpush1.msra.mxu0 0.0
    %739 = vmatprep.subr.mxu0 0.0
    %740 = vmatpush1.msra.mxu0 0.0
    %741 = vmatprep.subr.mxu0 0.0
    %742 = vmatpush1.msra.mxu0 0.0
    %743 = vmatprep.mubr.f32.mxu0 0.0
    %744 = vmatmul.mubr.f32.gmra.mrb[0].mxu0 %v677
    %v745 = vpop.f32.mrb[0].mxu0
    %v746 = vadd.f32 0.0, %v745
    %v747 = vpop.f32.mrb[0].mxu0
    %748 = vdwg.mxu0
    %750 = vrot.lane.b32.xlu0 %v746, 32
    %v751 = vpop.permute.xlu0 %750
    %v753 = vadd.f32 %v180, %v751
    %v754 = vtanh.pop %v672
    %v755 = vtanh.pop %v753
    %v756 = vlaneseq
    %v757 = vshrl.u32 %v756, 7
    %v758 = vsub.s32 3, %v757
    %v759 = vrot.slane %v30, %v758
    %761 = vrot.lane.b32.xlu0 %v759, 64
    %v762 = vpop.permute.xlu0 %761
    %v764 = vmul.f32 %v754, %v762
    %v766 = vrot.slane %v764, 6
    %v768 = vadd.f32 %v581, %v766
    %v769 = vlaneseq
    %v770 = vshrl.u32 %v769, 7
    %v771 = vsub.s32 4, %v770
    %v772 = vrot.slane %v30, %v771
    %774 = vrot.lane.b32.xlu0 %v772, 64
    %v775 = vpop.permute.xlu0 %774
    %v777 = vmul.f32 %v755, %v775
    %v779 = vrot.slane %v777, 2
    %v781 = vadd.f32 %v594, %v779
    %v783 = vrot.slane %v754, 6
    %v784 = vsel %vm203, %v783, 0
    %786 = vmatprep.subr.mxu0 0.0
    %787 = vmatpush1.msra.mxu0 %v25
    %788 = vmatprep.subr.mxu0 0.0
    %789 = vmatpush1.msra.mxu0 %v26
    %790 = vmatprep.subr.mxu0 0.0
    %791 = vmatpush1.msra.mxu0 %v27
    %792 = vmatprep.subr.mxu0 0.0
    %793 = vmatpush1.msra.mxu0 %v28
    %794 = vmatprep.subr.mxu0 0.0
    %795 = vmatpush1.msra.mxu0 0.0
    %796 = vmatprep.subr.mxu0 0.0
    %797 = vmatpush1.msra.mxu0 0.0
    %798 = vmatprep.subr.mxu0 0.0
    %799 = vmatpush1.msra.mxu0 0.0
    %800 = vmatprep.subr.mxu0 0.0
    %801 = vmatpush1.msra.mxu0 0.0
    %802 = vmatprep.subr.mxu0 0.0
    %803 = vmatpush1.msra.mxu0 0.0
    %804 = vmatprep.subr.mxu0 0.0
    %805 = vmatpush1.msra.mxu0 0.0
    %806 = vmatprep.subr.mxu0 0.0
    %807 = vmatpush1.msra.mxu0 0.0
    %808 = vmatprep.subr.mxu0 0.0
    %809 = vmatpush1.msra.mxu0 0.0
    %810 = vmatprep.subr.mxu0 0.0
    %811 = vmatpush1.msra.mxu0 0.0
    %812 = vmatprep.subr.mxu0 0.0
    %813 = vmatpush1.msra.mxu0 0.0
    %814 = vmatprep.subr.mxu0 0.0
    %815 = vmatpush1.msra.mxu0 0.0
    %816 = vmatprep.subr.mxu0 0.0
    %817 = vmatpush1.msra.mxu0 0.0
    %818 = vmatprep.subr.mxu0 0.0
    %819 = vmatpush1.msra.mxu0 0.0
    %820 = vmatprep.subr.mxu0 0.0
    %821 = vmatpush1.msra.mxu0 0.0
    %822 = vmatprep.subr.mxu0 0.0
    %823 = vmatpush1.msra.mxu0 0.0
    %824 = vmatprep.subr.mxu0 0.0
    %825 = vmatpush1.msra.mxu0 0.0
    %826 = vmatprep.subr.mxu0 0.0
    %827 = vmatpush1.msra.mxu0 0.0
    %828 = vmatprep.subr.mxu0 0.0
    %829 = vmatpush1.msra.mxu0 0.0
    %830 = vmatprep.subr.mxu0 0.0
    %831 = vmatpush1.msra.mxu0 0.0
    %832 = vmatprep.subr.mxu0 0.0
    %833 = vmatpush1.msra.mxu0 0.0
    %834 = vmatprep.subr.mxu0 0.0
    %835 = vmatpush1.msra.mxu0 0.0
    %836 = vmatprep.subr.mxu0 0.0
    %837 = vmatpush1.msra.mxu0 0.0
    %838 = vmatprep.subr.mxu0 0.0
    %839 = vmatpush1.msra.mxu0 0.0
    %840 = vmatprep.subr.mxu0 0.0
    %841 = vmatpush1.msra.mxu0 0.0
    %842 = vmatprep.subr.mxu0 0.0
    %843 = vmatpush1.msra.mxu0 0.0
    %844 = vmatprep.subr.mxu0 0.0
    %845 = vmatpush1.msra.mxu0 0.0
    %846 = vmatprep.subr.mxu0 0.0
    %847 = vmatpush1.msra.mxu0 0.0
    %848 = vmatprep.subr.mxu0 0.0
    %849 = vmatpush1.msra.mxu0 0.0
    %850 = vmatprep.mubr.f32.mxu0 0.0
    %851 = vmatmul.mubr.f32.gmra.mrb[0].mxu0 %v784
    %v852 = vpop.f32.mrb[0].mxu0
    %v853 = vadd.f32 0.0, %v852
    %v854 = vpop.f32.mrb[0].mxu0
    %855 = vdwg.mxu0
    %v856 = vadd.f32 %v180, %v853
    %858 = vrot.lane.b32.xlu0 %v755, 96
    %v859 = vpop.permute.xlu0 %858
    %v860 = vsel %vm203, %v859, 0
    %862 = vmatprep.subr.mxu0 0.0
    %863 = vmatpush1.msra.mxu0 %v290
    %864 = vmatprep.subr.mxu0 0.0
    %865 = vmatpush1.msra.mxu0 %v292
    %866 = vmatprep.subr.mxu0 0.0
    %867 = vmatpush1.msra.mxu0 %v294
    %868 = vmatprep.subr.mxu0 0.0
    %869 = vmatpush1.msra.mxu0 %v296
    %870 = vmatprep.subr.mxu0 0.0
    %871 = vmatpush1.msra.mxu0 0.0
    %872 = vmatprep.subr.mxu0 0.0
    %873 = vmatpush1.msra.mxu0 0.0
    %874 = vmatprep.subr.mxu0 0.0
    %875 = vmatpush1.msra.mxu0 0.0
    %876 = vmatprep.subr.mxu0 0.0
    %877 = vmatpush1.msra.mxu0 0.0
    %878 = vmatprep.subr.mxu0 0.0
    %879 = vmatpush1.msra.mxu0 0.0
    %880 = vmatprep.subr.mxu0 0.0
    %881 = vmatpush1.msra.mxu0 0.0
    %882 = vmatprep.subr.mxu0 0.0
    %883 = vmatpush1.msra.mxu0 0.0
    %884 = vmatprep.subr.mxu0 0.0
    %885 = vmatpush1.msra.mxu0 0.0
    %886 = vmatprep.subr.mxu0 0.0
    %887 = vmatpush1.msra.mxu0 0.0
    %888 = vmatprep.subr.mxu0 0.0
    %889 = vmatpush1.msra.mxu0 0.0
    %890 = vmatprep.subr.mxu0 0.0
    %891 = vmatpush1.msra.mxu0 0.0
    %892 = vmatprep.subr.mxu0 0.0
    %893 = vmatpush1.msra.mxu0 0.0
    %894 = vmatprep.subr.mxu0 0.0
    %895 = vmatpush1.msra.mxu0 0.0
    %896 = vmatprep.subr.mxu0 0.0
    %897 = vmatpush1.msra.mxu0 0.0
    %898 = vmatprep.subr.mxu0 0.0
    %899 = vmatpush1.msra.mxu0 0.0
    %900 = vmatprep.subr.mxu0 0.0
    %901 = vmatpush1.msra.mxu0 0.0
    %902 = vmatprep.subr.mxu0 0.0
    %903 = vmatpush1.msra.mxu0 0.0
    %904 = vmatprep.subr.mxu0 0.0
    %905 = vmatpush1.msra.mxu0 0.0
    %906 = vmatprep.subr.mxu0 0.0
    %907 = vmatpush1.msra.mxu0 0.0
    %908 = vmatprep.subr.mxu0 0.0
    %909 = vmatpush1.msra.mxu0 0.0
    %910 = vmatprep.subr.mxu0 0.0
    %911 = vmatpush1.msra.mxu0 0.0
    %912 = vmatprep.subr.mxu0 0.0
    %913 = vmatpush1.msra.mxu0 0.0
    %914 = vmatprep.subr.mxu0 0.0
    %915 = vmatpush1.msra.mxu0 0.0
    %916 = vmatprep.subr.mxu0 0.0
    %917 = vmatpush1.msra.mxu0 0.0
    %918 = vmatprep.subr.mxu0 0.0
    %919 = vmatpush1.msra.mxu0 0.0
    %920 = vmatprep.subr.mxu0 0.0
    %921 = vmatpush1.msra.mxu0 0.0
    %922 = vmatprep.subr.mxu0 0.0
    %923 = vmatpush1.msra.mxu0 0.0
    %924 = vmatprep.subr.mxu0 0.0
    %925 = vmatpush1.msra.mxu0 0.0
    %926 = vmatprep.mubr.f32.mxu0 0.0
    %927 = vmatmul.mubr.f32.gmra.mrb[0].mxu0 %v860
    %v928 = vpop.f32.mrb[0].mxu0
    %v929 = vadd.f32 0.0, %v928
    %v930 = vpop.f32.mrb[0].mxu0
    %931 = vdwg.mxu0
    %v933 = vrot.slane %v929, 2
    %934 = vrot.lane.b32.xlu0 %v933, 32
    %v935 = vpop.permute.xlu0 %934
    %v937 = vadd.f32 %v179, %v935
    %v938 = vtanh.pop %v856
    %v939 = vtanh.pop %v937
    %v940 = vmul.f32 %v938, %v775
    %v941 = vadd.f32 %v768, %v940
    %v942 = vmul.f32 %v939, %v762
    %v943 = vadd.f32 %v781, %v942
    %v945 = vsel %vm203, %v938, 0
    %947 = vmatprep.subr.mxu0 0.0
    %948 = vmatpush1.msra.mxu0 %v25
    %949 = vmatprep.subr.mxu0 0.0
    %950 = vmatpush1.msra.mxu0 %v26
    %951 = vmatprep.subr.mxu0 0.0
    %952 = vmatpush1.msra.mxu0 %v27
    %953 = vmatprep.subr.mxu0 0.0
    %954 = vmatpush1.msra.mxu0 %v28
    %955 = vmatprep.subr.mxu0 0.0
    %956 = vmatpush1.msra.mxu0 0.0
    %957 = vmatprep.subr.mxu0 0.0
    %958 = vmatpush1.msra.mxu0 0.0
    %959 = vmatprep.subr.mxu0 0.0
    %960 = vmatpush1.msra.mxu0 0.0
    %961 = vmatprep.subr.mxu0 0.0
    %962 = vmatpush1.msra.mxu0 0.0
    %963 = vmatprep.subr.mxu0 0.0
    %964 = vmatpush1.msra.mxu0 0.0
    %965 = vmatprep.subr.mxu0 0.0
    %966 = vmatpush1.msra.mxu0 0.0
    %967 = vmatprep.subr.mxu0 0.0
    %968 = vmatpush1.msra.mxu0 0.0
    %969 = vmatprep.subr.mxu0 0.0
    %970 = vmatpush1.msra.mxu0 0.0
    %971 = vmatprep.subr.mxu0 0.0
    %972 = vmatpush1.msra.mxu0 0.0
    %973 = vmatprep.subr.mxu0 0.0
    %974 = vmatpush1.msra.mxu0 0.0
    %975 = vmatprep.subr.mxu0 0.0
    %976 = vmatpush1.msra.mxu0 0.0
    %977 = vmatprep.subr.mxu0 0.0
    %978 = vmatpush1.msra.mxu0 0.0
    %979 = vmatprep.subr.mxu0 0.0
    %980 = vmatpush1.msra.mxu0 0.0
    %981 = vmatprep.subr.mxu0 0.0
    %982 = vmatpush1.msra.mxu0 0.0
    %983 = vmatprep.subr.mxu0 0.0
    %984 = vmatpush1.msra.mxu0 0.0
    %985 = vmatprep.subr.mxu0 0.0
    %986 = vmatpush1.msra.mxu0 0.0
    %987 = vmatprep.subr.mxu0 0.0
    %988 = vmatpush1.msra.mxu0 0.0
    %989 = vmatprep.subr.mxu0 0.0
    %990 = vmatpush1.msra.mxu0 0.0
    %991 = vmatprep.subr.mxu0 0.0
    %992 = vmatpush1.msra.mxu0 0.0
    %993 = vmatprep.subr.mxu0 0.0
    %994 = vmatpush1.msra.mxu0 0.0
    %995 = vmatprep.subr.mxu0 0.0
    %996 = vmatpush1.msra.mxu0 0.0
    %997 = vmatprep.subr.mxu0 0.0
    %998 = vmatpush1.msra.mxu0 0.0
    %999 = vmatprep.subr.mxu0 0.0
    %1000 = vmatpush1.msra.mxu0 0.0
    %1001 = vmatprep.subr.mxu0 0.0
    %1002 = vmatpush1.msra.mxu0 0.0
    %1003 = vmatprep.subr.mxu0 0.0
    %1004 = vmatpush1.msra.mxu0 0.0
    %1005 = vmatprep.subr.mxu0 0.0
    %1006 = vmatpush1.msra.mxu0 0.0
    %1007 = vmatprep.subr.mxu0 0.0
    %1008 = vmatpush1.msra.mxu0 0.0
    %1009 = vmatprep.subr.mxu0 0.0
    %1010 = vmatpush1.msra.mxu0 0.0
    %1011 = vmatprep.mubr.f32.mxu0 0.0
    %1012 = vmatmul.mubr.f32.gmra.mrb[0].mxu0 %v945
    %v1013 = vpop.f32.mrb[0].mxu0
    %v1014 = vadd.f32 0.0, %v1013
    %v1015 = vpop.f32.mrb[0].mxu0
    %1016 = vdwg.mxu0
    %v1018 = vrot.slane %v1014, 6
    %v1020 = vadd.f32 %v180, %v1018
    %v1022 = vrot.slane %v939, 6
    %1023 = vrot.lane.b32.xlu0 %v1022, 96
    %v1024 = vpop.permute.xlu0 %1023
    %v1025 = vsel %vm203, %v1024, 0
    %1027 = vmatprep.subr.mxu0 0.0
    %1028 = vmatpush1.msra.mxu0 %v290
    %1029 = vmatprep.subr.mxu0 0.0
    %1030 = vmatpush1.msra.mxu0 %v292
    %1031 = vmatprep.subr.mxu0 0.0
    %1032 = vmatpush1.msra.mxu0 %v294
    %1033 = vmatprep.subr.mxu0 0.0
    %1034 = vmatpush1.msra.mxu0 %v296
    %1035 = vmatprep.subr.mxu0 0.0
    %1036 = vmatpush1.msra.mxu0 0.0
    %1037 = vmatprep.subr.mxu0 0.0
    %1038 = vmatpush1.msra.mxu0 0.0
    %1039 = vmatprep.subr.mxu0 0.0
    %1040 = vmatpush1.msra.mxu0 0.0
    %1041 = vmatprep.subr.mxu0 0.0
    %1042 = vmatpush1.msra.mxu0 0.0
    %1043 = vmatprep.subr.mxu0 0.0
    %1044 = vmatpush1.msra.mxu0 0.0
    %1045 = vmatprep.subr.mxu0 0.0
    %1046 = vmatpush1.msra.mxu0 0.0
    %1047 = vmatprep.subr.mxu0 0.0
    %1048 = vmatpush1.msra.mxu0 0.0
    %1049 = vmatprep.subr.mxu0 0.0
    %1050 = vmatpush1.msra.mxu0 0.0
    %1051 = vmatprep.subr.mxu0 0.0
    %1052 = vmatpush1.msra.mxu0 0.0
    %1053 = vmatprep.subr.mxu0 0.0
    %1054 = vmatpush1.msra.mxu0 0.0
    %1055 = vmatprep.subr.mxu0 0.0
    %1056 = vmatpush1.msra.mxu0 0.0
    %1057 = vmatprep.subr.mxu0 0.0
    %1058 = vmatpush1.msra.mxu0 0.0
    %1059 = vmatprep.subr.mxu0 0.0
    %1060 = vmatpush1.msra.mxu0 0.0
    %1061 = vmatprep.subr.mxu0 0.0
    %1062 = vmatpush1.msra.mxu0 0.0
    %1063 = vmatprep.subr.mxu0 0.0
    %1064 = vmatpush1.msra.mxu0 0.0
    %1065 = vmatprep.subr.mxu0 0.0
    %1066 = vmatpush1.msra.mxu0 0.0
    %1067 = vmatprep.subr.mxu0 0.0
    %1068 = vmatpush1.msra.mxu0 0.0
    %1069 = vmatprep.subr.mxu0 0.0
    %1070 = vmatpush1.msra.mxu0 0.0
    %1071 = vmatprep.subr.mxu0 0.0
    %1072 = vmatpush1.msra.mxu0 0.0
    %1073 = vmatprep.subr.mxu0 0.0
    %1074 = vmatpush1.msra.mxu0 0.0
    %1075 = vmatprep.subr.mxu0 0.0
    %1076 = vmatpush1.msra.mxu0 0.0
    %1077 = vmatprep.subr.mxu0 0.0
    %1078 = vmatpush1.msra.mxu0 0.0
    %1079 = vmatprep.subr.mxu0 0.0
    %1080 = vmatpush1.msra.mxu0 0.0
    %1081 = vmatprep.subr.mxu0 0.0
    %1082 = vmatpush1.msra.mxu0 0.0
    %1083 = vmatprep.subr.mxu0 0.0
    %1084 = vmatpush1.msra.mxu0 0.0
    %1085 = vmatprep.subr.mxu0 0.0
    %1086 = vmatpush1.msra.mxu0 0.0
    %1087 = vmatprep.subr.mxu0 0.0
    %1088 = vmatpush1.msra.mxu0 0.0
    %1089 = vmatprep.subr.mxu0 0.0
    %1090 = vmatpush1.msra.mxu0 0.0
    %1091 = vmatprep.mubr.f32.mxu0 0.0
    %1092 = vmatmul.mubr.f32.gmra.mrb[0].mxu0 %v1025
    %v1093 = vpop.f32.mrb[0].mxu0
    %v1094 = vadd.f32 0.0, %v1093
    %v1095 = vpop.f32.mrb[0].mxu0
    %1096 = vdwg.mxu0
    %v1098 = vrot.slane %v1094, 4
    %1099 = vrot.lane.b32.xlu0 %v1098, 32
    %v1100 = vpop.permute.xlu0 %1099
    %v1102 = vadd.f32 %v179, %v1100
    %v1103 = vtanh.pop %v1020
    %v1104 = vtanh.pop %v1102
    %v1105 = vmul.f32 %v1103, %v588
    %v1107 = vrot.slane %v1105, 2
    %v1109 = vadd.f32 %v941, %v1107
    %v1110 = vmul.f32 %v1104, %v575
    %v1112 = vrot.slane %v1110, 6
    %v1114 = vadd.f32 %v943, %v1112
    %v1116 = vrot.slane %v1103, 2
    %v1117 = vsel %vm203, %v1116, 0
    %1119 = vmatprep.subr.mxu0 0.0
    %1120 = vmatpush1.msra.mxu0 %v25
    %1121 = vmatprep.subr.mxu0 0.0
    %1122 = vmatpush1.msra.mxu0 %v26
    %1123 = vmatprep.subr.mxu0 0.0
    %1124 = vmatpush1.msra.mxu0 %v27
    %1125 = vmatprep.subr.mxu0 0.0
    %1126 = vmatpush1.msra.mxu0 %v28
    %1127 = vmatprep.subr.mxu0 0.0
    %1128 = vmatpush1.msra.mxu0 0.0
    %1129 = vmatprep.subr.mxu0 0.0
    %1130 = vmatpush1.msra.mxu0 0.0
    %1131 = vmatprep.subr.mxu0 0.0
    %1132 = vmatpush1.msra.mxu0 0.0
    %1133 = vmatprep.subr.mxu0 0.0
    %1134 = vmatpush1.msra.mxu0 0.0
    %1135 = vmatprep.subr.mxu0 0.0
    %1136 = vmatpush1.msra.mxu0 0.0
    %1137 = vmatprep.subr.mxu0 0.0
    %1138 = vmatpush1.msra.mxu0 0.0
    %1139 = vmatprep.subr.mxu0 0.0
    %1140 = vmatpush1.msra.mxu0 0.0
    %1141 = vmatprep.subr.mxu0 0.0
    %1142 = vmatpush1.msra.mxu0 0.0
    %1143 = vmatprep.subr.mxu0 0.0
    %1144 = vmatpush1.msra.mxu0 0.0
    %1145 = vmatprep.subr.mxu0 0.0
    %1146 = vmatpush1.msra.mxu0 0.0
    %1147 = vmatprep.subr.mxu0 0.0
    %1148 = vmatpush1.msra.mxu0 0.0
    %1149 = vmatprep.subr.mxu0 0.0
    %1150 = vmatpush1.msra.mxu0 0.0
    %1151 = vmatprep.subr.mxu0 0.0
    %1152 = vmatpush1.msra.mxu0 0.0
    %1153 = vmatprep.subr.mxu0 0.0
    %1154 = vmatpush1.msra.mxu0 0.0
    %1155 = vmatprep.subr.mxu0 0.0
    %1156 = vmatpush1.msra.mxu0 0.0
    %1157 = vmatprep.subr.mxu0 0.0
    %1158 = vmatpush1.msra.mxu0 0.0
    %1159 = vmatprep.subr.mxu0 0.0
    %1160 = vmatpush1.msra.mxu0 0.0
    %1161 = vmatprep.subr.mxu0 0.0
    %1162 = vmatpush1.msra.mxu0 0.0
    %1163 = vmatprep.subr.mxu0 0.0
    %1164 = vmatpush1.msra.mxu0 0.0
    %1165 = vmatprep.subr.mxu0 0.0
    %1166 = vmatpush1.msra.mxu0 0.0
    %1167 = vmatprep.subr.mxu0 0.0
    %1168 = vmatpush1.msra.mxu0 0.0
    %1169 = vmatprep.subr.mxu0 0.0
    %1170 = vmatpush1.msra.mxu0 0.0
    %1171 = vmatprep.subr.mxu0 0.0
    %1172 = vmatpush1.msra.mxu0 0.0
    %1173 = vmatprep.subr.mxu0 0.0
    %1174 = vmatpush1.msra.mxu0 0.0
    %1175 = vmatprep.subr.mxu0 0.0
    %1176 = vmatpush1.msra.mxu0 0.0
    %1177 = vmatprep.subr.mxu0 0.0
    %1178 = vmatpush1.msra.mxu0 0.0
    %1179 = vmatprep.subr.mxu0 0.0
    %1180 = vmatpush1.msra.mxu0 0.0
    %1181 = vmatprep.subr.mxu0 0.0
    %1182 = vmatpush1.msra.mxu0 0.0
    %1183 = vmatprep.mubr.f32.mxu0 0.0
    %1184 = vmatmul.mubr.f32.gmra.mrb[0].mxu0 %v1117
    %v1185 = vpop.f32.mrb[0].mxu0
    %v1186 = vadd.f32 0.0, %v1185
    %v1187 = vpop.f32.mrb[0].mxu0
    %1188 = vdwg.mxu0
    %v1190 = vrot.slane %v1186, 4
    %v1192 = vadd.f32 %v180, %v1190
    %v1194 = vrot.slane %v1104, 4
    %1195 = vrot.lane.b32.xlu0 %v1194, 96
    %v1196 = vpop.permute.xlu0 %1195
    %v1197 = vsel %vm203, %v1196, 0
    %1199 = vmatprep.subr.mxu0 0.0
    %1200 = vmatpush1.msra.mxu0 %v290
    %1201 = vmatprep.subr.mxu0 0.0
    %1202 = vmatpush1.msra.mxu0 %v292
    %1203 = vmatprep.subr.mxu0 0.0
    %1204 = vmatpush1.msra.mxu0 %v294
    %1205 = vmatprep.subr.mxu0 0.0
    %1206 = vmatpush1.msra.mxu0 %v296
    %1207 = vmatprep.subr.mxu0 0.0
    %1208 = vmatpush1.msra.mxu0 0.0
    %1209 = vmatprep.subr.mxu0 0.0
    %1210 = vmatpush1.msra.mxu0 0.0
    %1211 = vmatprep.subr.mxu0 0.0
    %1212 = vmatpush1.msra.mxu0 0.0
    %1213 = vmatprep.subr.mxu0 0.0
    %1214 = vmatpush1.msra.mxu0 0.0
    %1215 = vmatprep.subr.mxu0 0.0
    %1216 = vmatpush1.msra.mxu0 0.0
    %1217 = vmatprep.subr.mxu0 0.0
    %1218 = vmatpush1.msra.mxu0 0.0
    %1219 = vmatprep.subr.mxu0 0.0
    %1220 = vmatpush1.msra.mxu0 0.0
    %1221 = vmatprep.subr.mxu0 0.0
    %1222 = vmatpush1.msra.mxu0 0.0
    %1223 = vmatprep.subr.mxu0 0.0
    %1224 = vmatpush1.msra.mxu0 0.0
    %1225 = vmatprep.subr.mxu0 0.0
    %1226 = vmatpush1.msra.mxu0 0.0
    %1227 = vmatprep.subr.mxu0 0.0
    %1228 = vmatpush1.msra.mxu0 0.0
    %1229 = vmatprep.subr.mxu0 0.0
    %1230 = vmatpush1.msra.mxu0 0.0
    %1231 = vmatprep.subr.mxu0 0.0
    %1232 = vmatpush1.msra.mxu0 0.0
    %1233 = vmatprep.subr.mxu0 0.0
    %1234 = vmatpush1.msra.mxu0 0.0
    %1235 = vmatprep.subr.mxu0 0.0
    %1236 = vmatpush1.msra.mxu0 0.0
    %1237 = vmatprep.subr.mxu0 0.0
    %1238 = vmatpush1.msra.mxu0 0.0
    %1239 = vmatprep.subr.mxu0 0.0
    %1240 = vmatpush1.msra.mxu0 0.0
    %1241 = vmatprep.subr.mxu0 0.0
    %1242 = vmatpush1.msra.mxu0 0.0
    %1243 = vmatprep.subr.mxu0 0.0
    %1244 = vmatpush1.msra.mxu0 0.0
    %1245 = vmatprep.subr.mxu0 0.0
    %1246 = vmatpush1.msra.mxu0 0.0
    %1247 = vmatprep.subr.mxu0 0.0
    %1248 = vmatpush1.msra.mxu0 0.0
    %1249 = vmatprep.subr.mxu0 0.0
    %1250 = vmatpush1.msra.mxu0 0.0
    %1251 = vmatprep.subr.mxu0 0.0
    %1252 = vmatpush1.msra.mxu0 0.0
    %1253 = vmatprep.subr.mxu0 0.0
    %1254 = vmatpush1.msra.mxu0 0.0
    %1255 = vmatprep.subr.mxu0 0.0
    %1256 = vmatpush1.msra.mxu0 0.0
    %1257 = vmatprep.subr.mxu0 0.0
    %1258 = vmatpush1.msra.mxu0 0.0
    %1259 = vmatprep.subr.mxu0 0.0
    %1260 = vmatpush1.msra.mxu0 0.0
    %1261 = vmatprep.subr.mxu0 0.0
    %1262 = vmatpush1.msra.mxu0 0.0
    %1263 = vmatprep.mubr.f32.mxu0 0.0
    %1264 = vmatmul.mubr.f32.gmra.mrb[0].mxu0 %v1197
    %v1265 = vpop.f32.mrb[0].mxu0
    %v1266 = vadd.f32 0.0, %v1265
    %v1267 = vpop.f32.mrb[0].mxu0
    %1268 = vdwg.mxu0
    %v1270 = vrot.slane %v1266, 6
    %1271 = vrot.lane.b32.xlu0 %v1270, 32
    %v1272 = vpop.permute.xlu0 %1271
    %v1274 = vadd.f32 %v179, %v1272
    %v1275 = vtanh.pop %v1192
    %v1276 = vtanh.pop %v1274
    %v1277 = vmul.f32 %v1275, %v400
    %v1279 = vrot.slane %v1277, 4
    %v1281 = vadd.f32 %v1109, %v1279
    %v1282 = vmul.f32 %v1276, %v387
    %v1284 = vrot.slane %v1282, 4
    %v1286 = vadd.f32 %v1114, %v1284
    %v1288 = vrot.slane %v1275, 4
    %v1289 = vsel %vm203, %v1288, 0
    %1291 = vmatprep.subr.mxu0 0.0
    %1292 = vmatpush1.msra.mxu0 %v25
    %1293 = vmatprep.subr.mxu0 0.0
    %1294 = vmatpush1.msra.mxu0 %v26
    %1295 = vmatprep.subr.mxu0 0.0
    %1296 = vmatpush1.msra.mxu0 %v27
    %1297 = vmatprep.subr.mxu0 0.0
    %1298 = vmatpush1.msra.mxu0 %v28
    %1299 = vmatprep.subr.mxu0 0.0
    %1300 = vmatpush1.msra.mxu0 0.0
    %1301 = vmatprep.subr.mxu0 0.0
    %1302 = vmatpush1.msra.mxu0 0.0
    %1303 = vmatprep.subr.mxu0 0.0
    %1304 = vmatpush1.msra.mxu0 0.0
    %1305 = vmatprep.subr.mxu0 0.0
    %1306 = vmatpush1.msra.mxu0 0.0
    %1307 = vmatprep.subr.mxu0 0.0
    %1308 = vmatpush1.msra.mxu0 0.0
    %1309 = vmatprep.subr.mxu0 0.0
    %1310 = vmatpush1.msra.mxu0 0.0
    %1311 = vmatprep.subr.mxu0 0.0
    %1312 = vmatpush1.msra.mxu0 0.0
    %1313 = vmatprep.subr.mxu0 0.0
    %1314 = vmatpush1.msra.mxu0 0.0
    %1315 = vmatprep.subr.mxu0 0.0
    %1316 = vmatpush1.msra.mxu0 0.0
    %1317 = vmatprep.subr.mxu0 0.0
    %1318 = vmatpush1.msra.mxu0 0.0
    %1319 = vmatprep.subr.mxu0 0.0
    %1320 = vmatpush1.msra.mxu0 0.0
    %1321 = vmatprep.subr.mxu0 0.0
    %1322 = vmatpush1.msra.mxu0 0.0
    %1323 = vmatprep.subr.mxu0 0.0
    %1324 = vmatpush1.msra.mxu0 0.0
    %1325 = vmatprep.subr.mxu0 0.0
    %1326 = vmatpush1.msra.mxu0 0.0
    %1327 = vmatprep.subr.mxu0 0.0
    %1328 = vmatpush1.msra.mxu0 0.0
    %1329 = vmatprep.subr.mxu0 0.0
    %1330 = vmatpush1.msra.mxu0 0.0
    %1331 = vmatprep.subr.mxu0 0.0
    %1332 = vmatpush1.msra.mxu0 0.0
    %1333 = vmatprep.subr.mxu0 0.0
    %1334 = vmatpush1.msra.mxu0 0.0
    %1335 = vmatprep.subr.mxu0 0.0
    %1336 = vmatpush1.msra.mxu0 0.0
    %1337 = vmatprep.subr.mxu0 0.0
    %1338 = vmatpush1.msra.mxu0 0.0
    %1339 = vmatprep.subr.mxu0 0.0
    %1340 = vmatpush1.msra.mxu0 0.0
    %1341 = vmatprep.subr.mxu0 0.0
    %1342 = vmatpush1.msra.mxu0 0.0
    %1343 = vmatprep.subr.mxu0 0.0
    %1344 = vmatpush1.msra.mxu0 0.0
    %1345 = vmatprep.subr.mxu0 0.0
    %1346 = vmatpush1.msra.mxu0 0.0
    %1347 = vmatprep.subr.mxu0 0.0
    %1348 = vmatpush1.msra.mxu0 0.0
    %1349 = vmatprep.subr.mxu0 0.0
    %1350 = vmatpush1.msra.mxu0 0.0
    %1351 = vmatprep.subr.mxu0 0.0
    %1352 = vmatpush1.msra.mxu0 0.0
    %1353 = vmatprep.subr.mxu0 0.0
    %1354 = vmatpush1.msra.mxu0 0.0
    %1355 = vmatprep.mubr.f32.mxu0 0.0
    %1356 = vmatmul.mubr.f32.gmra.mrb[0].mxu0 %v1289
    %v1357 = vpop.f32.mrb[0].mxu0
    %v1358 = vadd.f32 0.0, %v1357
    %v1359 = vpop.f32.mrb[0].mxu0
    %1360 = vdwg.mxu0
    %v1362 = vrot.slane %v1358, 2
    %v1364 = vadd.f32 %v180, %v1362
    %v1366 = vrot.slane %v1276, 2
    %1367 = vrot.lane.b32.xlu0 %v1366, 96
    %v1368 = vpop.permute.xlu0 %1367
    %v1369 = vsel %vm203, %v1368, 0
    %1371 = vmatprep.subr.mxu0 0.0
    %1372 = vmatpush1.msra.mxu0 %v290
    %1373 = vmatprep.subr.mxu0 0.0
    %1374 = vmatpush1.msra.mxu0 %v292
    %1375 = vmatprep.subr.mxu0 0.0
    %1376 = vmatpush1.msra.mxu0 %v294
    %1377 = vmatprep.subr.mxu0 0.0
    %1378 = vmatpush1.msra.mxu0 %v296
    %1379 = vmatprep.subr.mxu0 0.0
    %1380 = vmatpush1.msra.mxu0 0.0
    %1381 = vmatprep.subr.mxu0 0.0
    %1382 = vmatpush1.msra.mxu0 0.0
    %1383 = vmatprep.subr.mxu0 0.0
    %1384 = vmatpush1.msra.mxu0 0.0
    %1385 = vmatprep.subr.mxu0 0.0
    %1386 = vmatpush1.msra.mxu0 0.0
    %1387 = vmatprep.subr.mxu0 0.0
    %1388 = vmatpush1.msra.mxu0 0.0
    %1389 = vmatprep.subr.mxu0 0.0
    %1390 = vmatpush1.msra.mxu0 0.0
    %1391 = vmatprep.subr.mxu0 0.0
    %1392 = vmatpush1.msra.mxu0 0.0
    %1393 = vmatprep.subr.mxu0 0.0
    %1394 = vmatpush1.msra.mxu0 0.0
    %1395 = vmatprep.subr.mxu0 0.0
    %1396 = vmatpush1.msra.mxu0 0.0
    %1397 = vmatprep.subr.mxu0 0.0
    %1398 = vmatpush1.msra.mxu0 0.0
    %1399 = vmatprep.subr.mxu0 0.0
    %1400 = vmatpush1.msra.mxu0 0.0
    %1401 = vmatprep.subr.mxu0 0.0
    %1402 = vmatpush1.msra.mxu0 0.0
    %1403 = vmatprep.subr.mxu0 0.0
    %1404 = vmatpush1.msra.mxu0 0.0
    %1405 = vmatprep.subr.mxu0 0.0
    %1406 = vmatpush1.msra.mxu0 0.0
    %1407 = vmatprep.subr.mxu0 0.0
    %1408 = vmatpush1.msra.mxu0 0.0
    %1409 = vmatprep.subr.mxu0 0.0
    %1410 = vmatpush1.msra.mxu0 0.0
    %1411 = vmatprep.subr.mxu0 0.0
    %1412 = vmatpush1.msra.mxu0 0.0
    %1413 = vmatprep.subr.mxu0 0.0
    %1414 = vmatpush1.msra.mxu0 0.0
    %1415 = vmatprep.subr.mxu0 0.0
    %1416 = vmatpush1.msra.mxu0 0.0
    %1417 = vmatprep.subr.mxu0 0.0
    %1418 = vmatpush1.msra.mxu0 0.0
    %1419 = vmatprep.subr.mxu0 0.0
    %1420 = vmatpush1.msra.mxu0 0.0
    %1421 = vmatprep.subr.mxu0 0.0
    %1422 = vmatpush1.msra.mxu0 0.0
    %1423 = vmatprep.subr.mxu0 0.0
    %1424 = vmatpush1.msra.mxu0 0.0
    %1425 = vmatprep.subr.mxu0 0.0
    %1426 = vmatpush1.msra.mxu0 0.0
    %1427 = vmatprep.subr.mxu0 0.0
    %1428 = vmatpush1.msra.mxu0 0.0
    %1429 = vmatprep.subr.mxu0 0.0
    %1430 = vmatpush1.msra.mxu0 0.0
    %1431 = vmatprep.subr.mxu0 0.0
    %1432 = vmatpush1.msra.mxu0 0.0
    %1433 = vmatprep.subr.mxu0 0.0
    %1434 = vmatpush1.msra.mxu0 0.0
    %1435 = vmatprep.mubr.f32.mxu0 0.0
    %1436 = vmatmul.mubr.f32.gmra.mrb[0].mxu0 %v1369
    %v1437 = vpop.f32.mrb[0].mxu0
    %v1438 = vadd.f32 0.0, %v1437
    %v1439 = vpop.f32.mrb[0].mxu0
    %1440 = vdwg.mxu0
    %1442 = vrot.lane.b32.xlu0 %v1438, 32
    %v1443 = vpop.permute.xlu0 %1442
    %v1445 = vadd.f32 %v179, %v1443
    %v1446 = vtanh.pop %v1364
    %v1447 = vtanh.pop %v1445
    %v1448 = vmul.f32 %v1446, %v199
    %v1450 = vrot.slane %v1448, 6
    %v1452 = vadd.f32 %v1281, %v1450
    %v1453 = vmul.f32 %v1447, %v189
    %v1455 = vrot.slane %v1453, 2
    %v1457 = vadd.f32 %v1286, %v1455
    %v1459 = vrot.slane %v1457, 6
    %1460 = vrot.lane.b32.xlu0 %v1459, 96
    %v1461 = vpop.permute.xlu0 %1460
    %v1463 = vadd.f32 %v1452, %v1461
    %vm1464 = vcmask 254976
    %v1465 = vsel %vm1464, %v1463, 0.0
    %1466 = vadd.xlane.f32.xlu0 %v1465
    %v1467 = vpop.xlane.xlu0 %1466
    %v1468 = vadd.f32 %v1467, %v77
    %1470 = vrot.lane.b32.xlu0 %v1468, 56
    %v1471 = vpop.permute.xlu0 %1470
    %vm1473 = vcmask 1024
    %1474 = vst.msk [vmem:[%s2] sm:$0x3] %vm1473, %v1471
    // Predicated region
    $region14: #{tpu_custom_call.1} parent=1 // pred_check
      _
    $region15: #{tpu_custom_call.1} parent=1 // pred_check_branch
      %1476 = sbr.rel (0) target = $region17
    $region16: #{tpu_custom_call.1} parent=1 // pred_region
      _
    $region17: #{tpu_custom_call.1} parent=1 // pred_fallthru
      _
    // Predicated region
    $region18: #{tpu_custom_call.1} parent=1 // pred_check
      _
    $region19: #{tpu_custom_call.1} parent=1 // pred_check_branch
      %1478 = sbr.rel (0) target = $region21
    $region20: #{tpu_custom_call.1} parent=1 // pred_region
      _
    $region21: #{tpu_custom_call.1} parent=1 // pred_fallthru
      _
    %1479 = vsyncpa [#allocation3], 1

</llo_original>
